<compile_context>
chip_gen: v6e
topology: v6e:2x2x1
jax: 0.10.0
libtpu: 0.0.40
codegen_flags: <defaults>
</compile_context>

<pallas_src>
import math

import jax
import jax.numpy as jnp
from jax.experimental import pallas as pl
from jax.experimental.pallas import tpu as pltpu

_IN = 784
_HID = 256
_OUT = 10
_OUT_PAD = 128   # 10 padded up to 128 output lanes (lane-dense stores)


def _round_up(n, m):
    return ((n + m - 1) // m) * m


def mlp_kernel(x_ref,
               w1_ref, b1_ref, w2_ref, b2_ref, w3_ref, b3_ref,
               w4_ref, b4_ref, w5_ref, b5_ref,
               out_ref, h1_ref, h2_ref, h3_ref, h4_ref):
    """One batch tile of the fused MLP forward.

    Weights are bf16 (MXU-native); activations accumulate in f32; hidden
    activations are stored in h*_ref's dtype (bf16 by default).
    """
    # TODO(synk): nn.Dropout() is identity in eval mode; training-mode dropout
    # masking is not implemented here.
    x = x_ref[...].astype(jnp.bfloat16)

    h1 = jax.nn.sigmoid(
        jnp.dot(x, w1_ref[...], preferred_element_type=jnp.float32)
        + b1_ref[...]).astype(jnp.bfloat16)
    h1_ref[...] = h1.astype(h1_ref.dtype)

    h2 = jax.nn.sigmoid(
        jnp.dot(h1, w2_ref[...], preferred_element_type=jnp.float32)
        + b2_ref[...]).astype(jnp.bfloat16)
    h2_ref[...] = h2.astype(h2_ref.dtype)

    h3 = jax.nn.sigmoid(
        jnp.dot(h2, w3_ref[...], preferred_element_type=jnp.float32)
        + b3_ref[...]).astype(jnp.bfloat16)
    h3_ref[...] = h3.astype(h3_ref.dtype)

    h4 = jax.nn.sigmoid(
        jnp.dot(h3, w4_ref[...], preferred_element_type=jnp.float32)
        + b4_ref[...]).astype(jnp.bfloat16)
    h4_ref[...] = h4.astype(h4_ref.dtype)

    out_ref[...] = (
        jnp.dot(h4, w5_ref[...], preferred_element_type=jnp.float32)
        + b5_ref[...]).astype(out_ref.dtype)


def prep_params(params):
    """Cast/pad params to the kernel layout.  Do this ONCE, outside the
    per-forward path (weights stored as (in, out), biases as (1, out))."""
    (w1, b1), (w2, b2), (w3, b3), (w4, b4), (w5, b5) = params
    w5p = jnp.pad(w5, ((0, 0), (0, _OUT_PAD - w5.shape[1]))).astype(jnp.bfloat16)
    b5p = jnp.pad(b5, ((0, 0), (0, _OUT_PAD - b5.shape[1]))).astype(jnp.float32)
    return (w1.astype(jnp.bfloat16), b1.astype(jnp.float32),
            w2.astype(jnp.bfloat16), b2.astype(jnp.float32),
            w3.astype(jnp.bfloat16), b3.astype(jnp.float32),
            w4.astype(jnp.bfloat16), b4.astype(jnp.float32),
            w5p, b5p)


def net_forward(x_nchw, prepped_params, *, tile_m=1024,
                hidden_dtype=jnp.bfloat16, vmem_limit_bytes=32 << 20):
    """Mirrors Net.forward: returns (logits, results) with
    results == [x_flat, h1, h2, h3, h4, logits]."""
    B = x_nchw.shape[0]
    x_flat = x_nchw.reshape(B, _IN).astype(jnp.float32)

    # Batch tile: multiple of 8, <= tile_m, and <= ceil(B/2) rounded up so the
    # grid has >=2 steps whenever possible (keeps both v7x TensorCores busy).
    TM = max(8, min(tile_m, _round_up(pl.cdiv(B, 2), 8)))
    B_pad = _round_up(B, TM)
    x_in = x_flat if B_pad == B else jnp.pad(x_flat, ((0, B_pad - B), (0, 0)))

    w1, b1, w2, b2, w3, b3, w4, b4, w5, b5 = prepped_params

    grid = (B_pad // TM,)
    batch_map = lambda i: (i, 0)   # tiles over the batch
    const_map = lambda i: (0, 0)   # weights stay resident across tiles

    in_specs = [
        pl.BlockSpec((TM, _IN), batch_map),          # x (no feature pad)
        pl.BlockSpec((_IN, _HID), const_map),        # w1
        pl.BlockSpec((1, _HID), const_map),          # b1
        pl.BlockSpec((_HID, _HID), const_map),       # w2
        pl.BlockSpec((1, _HID), const_map),          # b2
        pl.BlockSpec((_HID, _HID), const_map),       # w3
        pl.BlockSpec((1, _HID), const_map),          # b3
        pl.BlockSpec((_HID, _HID), const_map),       # w4
        pl.BlockSpec((1, _HID), const_map),          # b4
        pl.BlockSpec((_HID, _OUT_PAD), const_map),   # w5 (10 -> 128 padded)
        pl.BlockSpec((1, _OUT_PAD), const_map),      # b5
    ]
    out_specs = (
        pl.BlockSpec((TM, _OUT_PAD), batch_map),     # logits (lane-dense)
        pl.BlockSpec((TM, _HID), batch_map),         # h1
        pl.BlockSpec((TM, _HID), batch_map),         # h2
        pl.BlockSpec((TM, _HID), batch_map),         # h3
        pl.BlockSpec((TM, _HID), batch_map),         # h4
    )
    out_shapes = (
        jax.ShapeDtypeStruct((B_pad, _OUT_PAD), jnp.float32),
        jax.ShapeDtypeStruct((B_pad, _HID), hidden_dtype),
        jax.ShapeDtypeStruct((B_pad, _HID), hidden_dtype),
        jax.ShapeDtypeStruct((B_pad, _HID), hidden_dtype),
        jax.ShapeDtypeStruct((B_pad, _HID), hidden_dtype),
    )

    logits_pad, h1, h2, h3, h4 = pl.pallas_call(
        mlp_kernel,
        out_shape=out_shapes,
        grid=grid,
        in_specs=in_specs,
        out_specs=out_specs,
        compiler_params=pltpu.CompilerParams(
            dimension_semantics=("parallel",),   # batch tiles shard across TCs (v7x)
            vmem_limit_bytes=vmem_limit_bytes,
        ),
    )(x_in, w1, b1, w2, b2, w3, b3, w4, b4, w5, b5)

    if B_pad != B:  # only trim when we actually padded (keeps slices view-like)
        logits_pad = logits_pad[:B]
        h1, h2, h3, h4 = h1[:B], h2[:B], h3[:B], h4[:B]
    logits = logits_pad[:, :_OUT]
    results = [x_flat, h1, h2, h3, h4, logits]
    return logits, results


def init_params(key):
    """Deterministic init matching nn.Linear shapes (uniform +-1/sqrt(fan_in)).
    Weights stored as (in, out); biases as (1, out)."""
    dims = [(784, 256), (256, 256), (256, 256), (256, 256), (256, 10)]
    params = []
    for fan_in, fan_out in dims:
        key, kw, kb = jax.random.split(key, 3)
        bound = 1.0 / math.sqrt(fan_in)
        w = jax.random.uniform(kw, (fan_in, fan_out), jnp.float32,
                               minval=-bound, maxval=bound)
        b = jax.random.uniform(kb, (1, fan_out), jnp.float32,
                               minval=-bound, maxval=bound)
        params.append((w, b))
    return params


if __name__ == "__main__":
    key = jax.random.PRNGKey(0)
    key, kx = jax.random.split(key)

    B = 8
    x = jax.random.normal(kx, (B, 1, 28, 28), dtype=jnp.float32)  # NCHW

    params = init_params(key)
    prepped = prep_params(params)   # hoisted out of the per-forward path

    logits, results = net_forward(x, prepped)
    jax.block_until_ready(logits)
    for r in results:
        jax.block_until_ready(r)

    # light sanity checks
    assert logits.shape == (B, 10)
    assert results[0].shape == (B, 784)
    assert all(r.shape == (B, 256) for r in results[1:5])
    assert results[5].shape == (B, 10)
    assert bool(jnp.all(jnp.isfinite(logits)))
    h1_f32 = results[1].astype(jnp.float32)
    assert bool(jnp.all((h1_f32 >= 0.0) & (h1_f32 <= 1.0)))

    print("KERNEL_OK")
</pallas_src>

<mosaic_0001>
module attributes {stable_mosaic.version = 11 : i64} {
  func.func @mlp_kernel(%arg0: i32, %arg1: memref<8x784xf32, #tpu.memory_space<vmem>>, %arg2: memref<784x256xbf16, #tpu.memory_space<vmem>>, %arg3: memref<1x256xf32, #tpu.memory_space<vmem>>, %arg4: memref<256x256xbf16, #tpu.memory_space<vmem>>, %arg5: memref<1x256xf32, #tpu.memory_space<vmem>>, %arg6: memref<256x256xbf16, #tpu.memory_space<vmem>>, %arg7: memref<1x256xf32, #tpu.memory_space<vmem>>, %arg8: memref<256x256xbf16, #tpu.memory_space<vmem>>, %arg9: memref<1x256xf32, #tpu.memory_space<vmem>>, %arg10: memref<256x128xbf16, #tpu.memory_space<vmem>>, %arg11: memref<1x128xf32, #tpu.memory_space<vmem>>, %arg12: memref<8x128xf32, #tpu.memory_space<vmem>>, %arg13: memref<8x256xbf16, #tpu.memory_space<vmem>>, %arg14: memref<8x256xbf16, #tpu.memory_space<vmem>>, %arg15: memref<8x256xbf16, #tpu.memory_space<vmem>>, %arg16: memref<8x256xbf16, #tpu.memory_space<vmem>>) attributes {dimension_semantics = [#tpu.dimension_semantics<parallel>], iteration_bounds = array<i64: 1>, scalar_prefetch = 0 : i64, scratch_operands = 0 : i64, tpu.core_type = #tpu.core_type<tc>, window_params = [{transform_indices = @transform_0, window_bounds = array<i64: 8, 784>}, {pipeline_mode = #tpu.pipeline_mode<synchronous>, transform_indices = @transform_1, window_bounds = array<i64: 784, 256>}, {pipeline_mode = #tpu.pipeline_mode<synchronous>, transform_indices = @transform_2, window_bounds = array<i64: 1, 256>}, {pipeline_mode = #tpu.pipeline_mode<synchronous>, transform_indices = @transform_3, window_bounds = array<i64: 256, 256>}, {pipeline_mode = #tpu.pipeline_mode<synchronous>, transform_indices = @transform_4, window_bounds = array<i64: 1, 256>}, {pipeline_mode = #tpu.pipeline_mode<synchronous>, transform_indices = @transform_5, window_bounds = array<i64: 256, 256>}, {pipeline_mode = #tpu.pipeline_mode<synchronous>, transform_indices = @transform_6, window_bounds = array<i64: 1, 256>}, {pipeline_mode = #tpu.pipeline_mode<synchronous>, transform_indices = @transform_7, window_bounds = array<i64: 256, 256>}, {pipeline_mode = #tpu.pipeline_mode<synchronous>, transform_indices = @transform_8, window_bounds = array<i64: 1, 256>}, {pipeline_mode = #tpu.pipeline_mode<synchronous>, transform_indices = @transform_9, window_bounds = array<i64: 256, 128>}, {pipeline_mode = #tpu.pipeline_mode<synchronous>, transform_indices = @transform_10, window_bounds = array<i64: 1, 128>}, {transform_indices = @transform_11, window_bounds = array<i64: 8, 128>}, {transform_indices = @transform_12, window_bounds = array<i64: 8, 256>}, {transform_indices = @transform_13, window_bounds = array<i64: 8, 256>}, {transform_indices = @transform_14, window_bounds = array<i64: 8, 256>}, {transform_indices = @transform_15, window_bounds = array<i64: 8, 256>}]} {
    %c0 = arith.constant 0 : index
    %c0_0 = arith.constant 0 : index
    %0 = vector.load %arg1[%c0, %c0_0] : memref<8x784xf32, #tpu.memory_space<vmem>>, vector<8x784xf32>
    %1 = arith.truncf %0 : vector<8x784xf32> to vector<8x784xbf16>
    %c0_1 = arith.constant 0 : index
    %c0_2 = arith.constant 0 : index
    %2 = vector.load %arg2[%c0_1, %c0_2] : memref<784x256xbf16, #tpu.memory_space<vmem>>, vector<784x256xbf16>
    %cst = arith.constant dense<0.000000e+00> : vector<8x256xf32>
    %3 = tpu.matmul %1, %2, %cst {dimension_numbers = #tpu.dot_dimension_numbers<[1], [0], [0], [1], [0, 0, 1, 1], [], []>} : vector<8x784xbf16>, vector<784x256xbf16>, vector<8x256xf32> -> vector<8x256xf32>
    %c0_3 = arith.constant 0 : index
    %c0_4 = arith.constant 0 : index
    %4 = vector.load %arg3[%c0_3, %c0_4] : memref<1x256xf32, #tpu.memory_space<vmem>>, vector<1x256xf32>
    %5 = vector.broadcast %4 : vector<1x256xf32> to vector<8x256xf32>
    %6 = arith.addf %3, %5 : vector<8x256xf32>
    %7 = arith.negf %6 : vector<8x256xf32>
    %8 = math.exp %7 : vector<8x256xf32>
    %cst_5 = arith.constant 1.000000e+00 : f32
    %9 = vector.broadcast %cst_5 : f32 to vector<8x256xf32>
    %10 = arith.addf %9, %8 : vector<8x256xf32>
    %11 = arith.divf %9, %10 : vector<8x256xf32>
    %12 = arith.truncf %11 : vector<8x256xf32> to vector<8x256xbf16>
    %c0_6 = arith.constant 0 : index
    %c0_7 = arith.constant 0 : index
    %13 = vector.load %arg13[%c0_6, %c0_7] : memref<8x256xbf16, #tpu.memory_space<vmem>>, vector<8x256xbf16>
    tpu.vector_store %arg13[%c0_6, %c0_7], %12 {strides = array<i32>} : memref<8x256xbf16, #tpu.memory_space<vmem>>, vector<8x256xbf16>,
    %c0_8 = arith.constant 0 : index
    %c0_9 = arith.constant 0 : index
    %14 = vector.load %arg4[%c0_8, %c0_9] : memref<256x256xbf16, #tpu.memory_space<vmem>>, vector<256x256xbf16>
    %cst_10 = arith.constant dense<0.000000e+00> : vector<8x256xf32>
    %15 = tpu.matmul %12, %14, %cst_10 {dimension_numbers = #tpu.dot_dimension_numbers<[1], [0], [0], [1], [0, 0, 1, 1], [], []>} : vector<8x256xbf16>, vector<256x256xbf16>, vector<8x256xf32> -> vector<8x256xf32>
    %c0_11 = arith.constant 0 : index
    %c0_12 = arith.constant 0 : index
    %16 = vector.load %arg5[%c0_11, %c0_12] : memref<1x256xf32, #tpu.memory_space<vmem>>, vector<1x256xf32>
    %17 = vector.broadcast %16 : vector<1x256xf32> to vector<8x256xf32>
    %18 = arith.addf %15, %17 : vector<8x256xf32>
    %19 = arith.negf %18 : vector<8x256xf32>
    %20 = math.exp %19 : vector<8x256xf32>
    %cst_13 = arith.constant 1.000000e+00 : f32
    %21 = vector.broadcast %cst_13 : f32 to vector<8x256xf32>
    %22 = arith.addf %21, %20 : vector<8x256xf32>
    %23 = arith.divf %21, %22 : vector<8x256xf32>
    %24 = arith.truncf %23 : vector<8x256xf32> to vector<8x256xbf16>
    %c0_14 = arith.constant 0 : index
    %c0_15 = arith.constant 0 : index
    %25 = vector.load %arg14[%c0_14, %c0_15] : memref<8x256xbf16, #tpu.memory_space<vmem>>, vector<8x256xbf16>
    tpu.vector_store %arg14[%c0_14, %c0_15], %24 {strides = array<i32>} : memref<8x256xbf16, #tpu.memory_space<vmem>>, vector<8x256xbf16>,
    %c0_16 = arith.constant 0 : index
    %c0_17 = arith.constant 0 : index
    %26 = vector.load %arg6[%c0_16, %c0_17] : memref<256x256xbf16, #tpu.memory_space<vmem>>, vector<256x256xbf16>
    %cst_18 = arith.constant dense<0.000000e+00> : vector<8x256xf32>
    %27 = tpu.matmul %24, %26, %cst_18 {dimension_numbers = #tpu.dot_dimension_numbers<[1], [0], [0], [1], [0, 0, 1, 1], [], []>} : vector<8x256xbf16>, vector<256x256xbf16>, vector<8x256xf32> -> vector<8x256xf32>
    %c0_19 = arith.constant 0 : index
    %c0_20 = arith.constant 0 : index
    %28 = vector.load %arg7[%c0_19, %c0_20] : memref<1x256xf32, #tpu.memory_space<vmem>>, vector<1x256xf32>
    %29 = vector.broadcast %28 : vector<1x256xf32> to vector<8x256xf32>
    %30 = arith.addf %27, %29 : vector<8x256xf32>
    %31 = arith.negf %30 : vector<8x256xf32>
    %32 = math.exp %31 : vector<8x256xf32>
    %cst_21 = arith.constant 1.000000e+00 : f32
    %33 = vector.broadcast %cst_21 : f32 to vector<8x256xf32>
    %34 = arith.addf %33, %32 : vector<8x256xf32>
    %35 = arith.divf %33, %34 : vector<8x256xf32>
    %36 = arith.truncf %35 : vector<8x256xf32> to vector<8x256xbf16>
    %c0_22 = arith.constant 0 : index
    %c0_23 = arith.constant 0 : index
    %37 = vector.load %arg15[%c0_22, %c0_23] : memref<8x256xbf16, #tpu.memory_space<vmem>>, vector<8x256xbf16>
    tpu.vector_store %arg15[%c0_22, %c0_23], %36 {strides = array<i32>} : memref<8x256xbf16, #tpu.memory_space<vmem>>, vector<8x256xbf16>,
    %c0_24 = arith.constant 0 : index
    %c0_25 = arith.constant 0 : index
    %38 = vector.load %arg8[%c0_24, %c0_25] : memref<256x256xbf16, #tpu.memory_space<vmem>>, vector<256x256xbf16>
    %cst_26 = arith.constant dense<0.000000e+00> : vector<8x256xf32>
    %39 = tpu.matmul %36, %38, %cst_26 {dimension_numbers = #tpu.dot_dimension_numbers<[1], [0], [0], [1], [0, 0, 1, 1], [], []>} : vector<8x256xbf16>, vector<256x256xbf16>, vector<8x256xf32> -> vector<8x256xf32>
    %c0_27 = arith.constant 0 : index
    %c0_28 = arith.constant 0 : index
    %40 = vector.load %arg9[%c0_27, %c0_28] : memref<1x256xf32, #tpu.memory_space<vmem>>, vector<1x256xf32>
    %41 = vector.broadcast %40 : vector<1x256xf32> to vector<8x256xf32>
    %42 = arith.addf %39, %41 : vector<8x256xf32>
    %43 = arith.negf %42 : vector<8x256xf32>
    %44 = math.exp %43 : vector<8x256xf32>
    %cst_29 = arith.constant 1.000000e+00 : f32
    %45 = vector.broadcast %cst_29 : f32 to vector<8x256xf32>
    %46 = arith.addf %45, %44 : vector<8x256xf32>
    %47 = arith.divf %45, %46 : vector<8x256xf32>
    %48 = arith.truncf %47 : vector<8x256xf32> to vector<8x256xbf16>
    %c0_30 = arith.constant 0 : index
    %c0_31 = arith.constant 0 : index
    %49 = vector.load %arg16[%c0_30, %c0_31] : memref<8x256xbf16, #tpu.memory_space<vmem>>, vector<8x256xbf16>
    tpu.vector_store %arg16[%c0_30, %c0_31], %48 {strides = array<i32>} : memref<8x256xbf16, #tpu.memory_space<vmem>>, vector<8x256xbf16>,
    %c0_32 = arith.constant 0 : index
    %c0_33 = arith.constant 0 : index
    %50 = vector.load %arg10[%c0_32, %c0_33] : memref<256x128xbf16, #tpu.memory_space<vmem>>, vector<256x128xbf16>
    %cst_34 = arith.constant dense<0.000000e+00> : vector<8x128xf32>
    %51 = tpu.matmul %48, %50, %cst_34 {dimension_numbers = #tpu.dot_dimension_numbers<[1], [0], [0], [1], [0, 0, 1, 1], [], []>} : vector<8x256xbf16>, vector<256x128xbf16>, vector<8x128xf32> -> vector<8x128xf32>
    %c0_35 = arith.constant 0 : index
    %c0_36 = arith.constant 0 : index
    %52 = vector.load %arg11[%c0_35, %c0_36] : memref<1x128xf32, #tpu.memory_space<vmem>>, vector<1x128xf32>
    %53 = vector.broadcast %52 : vector<1x128xf32> to vector<8x128xf32>
    %54 = arith.addf %51, %53 : vector<8x128xf32>
    %c0_37 = arith.constant 0 : index
    %c0_38 = arith.constant 0 : index
    %55 = vector.load %arg12[%c0_37, %c0_38] : memref<8x128xf32, #tpu.memory_space<vmem>>, vector<8x128xf32>
    tpu.vector_store %arg12[%c0_37, %c0_38], %54 {strides = array<i32>} : memref<8x128xf32, #tpu.memory_space<vmem>>, vector<8x128xf32>,
    return
  }
  func.func @transform_0(%arg0: i32) -> (i32, i32) {
    %c0_i32 = arith.constant 0 : i32
    %c0_i32_0 = arith.constant 0 : i32
    return %arg0, %c0_i32 : i32, i32
  }
  func.func @transform_1(%arg0: i32) -> (i32, i32) {
    %c0_i32 = arith.constant 0 : i32
    %c0_i32_0 = arith.constant 0 : i32
    %c0_i32_1 = arith.constant 0 : i32
    return %c0_i32, %c0_i32_0 : i32, i32
  }
  func.func @transform_2(%arg0: i32) -> (i32, i32) {
    %c0_i32 = arith.constant 0 : i32
    %c0_i32_0 = arith.constant 0 : i32
    %c0_i32_1 = arith.constant 0 : i32
    return %c0_i32, %c0_i32_0 : i32, i32
  }
  func.func @transform_3(%arg0: i32) -> (i32, i32) {
    %c0_i32 = arith.constant 0 : i32
    %c0_i32_0 = arith.constant 0 : i32
    %c0_i32_1 = arith.constant 0 : i32
    return %c0_i32, %c0_i32_0 : i32, i32
  }
  func.func @transform_4(%arg0: i32) -> (i32, i32) {
    %c0_i32 = arith.constant 0 : i32
    %c0_i32_0 = arith.constant 0 : i32
    %c0_i32_1 = arith.constant 0 : i32
    return %c0_i32, %c0_i32_0 : i32, i32
  }
  func.func @transform_5(%arg0: i32) -> (i32, i32) {
    %c0_i32 = arith.constant 0 : i32
    %c0_i32_0 = arith.constant 0 : i32
    %c0_i32_1 = arith.constant 0 : i32
    return %c0_i32, %c0_i32_0 : i32, i32
  }
  func.func @transform_6(%arg0: i32) -> (i32, i32) {
    %c0_i32 = arith.constant 0 : i32
    %c0_i32_0 = arith.constant 0 : i32
    %c0_i32_1 = arith.constant 0 : i32
    return %c0_i32, %c0_i32_0 : i32, i32
  }
  func.func @transform_7(%arg0: i32) -> (i32, i32) {
    %c0_i32 = arith.constant 0 : i32
    %c0_i32_0 = arith.constant 0 : i32
    %c0_i32_1 = arith.constant 0 : i32
    return %c0_i32, %c0_i32_0 : i32, i32
  }
  func.func @transform_8(%arg0: i32) -> (i32, i32) {
    %c0_i32 = arith.constant 0 : i32
    %c0_i32_0 = arith.constant 0 : i32
    %c0_i32_1 = arith.constant 0 : i32
    return %c0_i32, %c0_i32_0 : i32, i32
  }
  func.func @transform_9(%arg0: i32) -> (i32, i32) {
    %c0_i32 = arith.constant 0 : i32
    %c0_i32_0 = arith.constant 0 : i32
    %c0_i32_1 = arith.constant 0 : i32
    return %c0_i32, %c0_i32_0 : i32, i32
  }
  func.func @transform_10(%arg0: i32) -> (i32, i32) {
    %c0_i32 = arith.constant 0 : i32
    %c0_i32_0 = arith.constant 0 : i32
    %c0_i32_1 = arith.constant 0 : i32
    return %c0_i32, %c0_i32_0 : i32, i32
  }
  func.func @transform_11(%arg0: i32) -> (i32, i32) {
    %c0_i32 = arith.constant 0 : i32
    %c0_i32_0 = arith.constant 0 : i32
    return %arg0, %c0_i32 : i32, i32
  }
  func.func @transform_12(%arg0: i32) -> (i32, i32) {
    %c0_i32 = arith.constant 0 : i32
    %c0_i32_0 = arith.constant 0 : i32
    return %arg0, %c0_i32 : i32, i32
  }
  func.func @transform_13(%arg0: i32) -> (i32, i32) {
    %c0_i32 = arith.constant 0 : i32
    %c0_i32_0 = arith.constant 0 : i32
    return %arg0, %c0_i32 : i32, i32
  }
  func.func @transform_14(%arg0: i32) -> (i32, i32) {
    %c0_i32 = arith.constant 0 : i32
    %c0_i32_0 = arith.constant 0 : i32
    return %arg0, %c0_i32 : i32, i32
  }
  func.func @transform_15(%arg0: i32) -> (i32, i32) {
    %c0_i32 = arith.constant 0 : i32
    %c0_i32_0 = arith.constant 0 : i32
    return %arg0, %c0_i32 : i32, i32
  }
}

</mosaic_0001>

<llo_original>
// kernel: tpu_custom_call.1
$region0: #{tpu_custom_call.1}
  #allocation0 [shape = 'u32[]', space=smem, size = 0x4, offset = 0x4, fixed_abs, tag = 'smem constant byte address 0x4 - core index']
  #allocation1 [shape = 'u32[144,128]{1,0:T(1,128)}', space=vmem, size = 0x12000, scoped, tag = 'internal scratch']
  %s0 = inlined_call_operand.hbm [shape: f32[8,784], index: 0, kind: input, shape index: {}]
  %s1 = inlined_call_operand.hbm [shape: bf16[784,256], index: 1, kind: input, shape index: {}]
  %s2 = inlined_call_operand.vmem [shape: f32[1,256], index: 2, kind: input, shape index: {}]
  %s3 = inlined_call_operand.hbm [shape: bf16[256,256], index: 3, kind: input, shape index: {}]
  %s4 = inlined_call_operand.vmem [shape: f32[1,256], index: 4, kind: input, shape index: {}]
  %s5 = inlined_call_operand.hbm [shape: bf16[256,256], index: 5, kind: input, shape index: {}]
  %s6 = inlined_call_operand.vmem [shape: f32[1,256], index: 6, kind: input, shape index: {}]
  %s7 = inlined_call_operand.hbm [shape: bf16[256,256], index: 7, kind: input, shape index: {}]
  %s8 = inlined_call_operand.vmem [shape: f32[1,256], index: 8, kind: input, shape index: {}]
  %s9 = inlined_call_operand.hbm [shape: bf16[256,128], index: 9, kind: input, shape index: {}]
  %s10 = inlined_call_operand.vmem [shape: f32[1,128], index: 10, kind: input, shape index: {}]
  %s11 = inlined_call_operand.hbm [shape: f32[8,128], index: 11, kind: output, shape index: {0}]
  %s12 = inlined_call_operand.hbm [shape: bf16[8,256], index: 12, kind: output, shape index: {1}]
  %s13 = inlined_call_operand.hbm [shape: bf16[8,256], index: 13, kind: output, shape index: {2}]
  %s14 = inlined_call_operand.hbm [shape: bf16[8,256], index: 14, kind: output, shape index: {3}]
  %s15 = inlined_call_operand.hbm [shape: bf16[8,256], index: 15, kind: output, shape index: {4}]
  %16 = xla_tuple %s11, %s12, %s13, %s14, %s15
  %s17 = sld [smem:[#allocation0]]
  $region110: #{tpu_custom_call.1} parent=0
    _
  %s19 = ssub.s32 1, %s17
  %s20 = scalar_select 0, %s19, %s17
  $region1: #{tpu_custom_call.1} parent=0
    #allocation2 [shape = 'u8[28672]{0}', space=vmem, size = 0x7000, scoped, tag = 'input window, operand 0, single buffered']
    #allocation3 [shape = 's32[1]{0}', space=sflag, size = 0x4, scoped, tag = 'scoped memory for tpu_custom_call.1']
    #allocation4 [shape = 's32[1]{0}', space=sflag, size = 0x4, scoped, tag = 'scoped memory for tpu_custom_call.1']
    #allocation5 [shape = 'u8[401408]{0}', space=vmem, size = 0x62000, scoped, tag = 'input window, operand 1, single buffered']
    #allocation6 [shape = 's32[1]{0}', space=sflag, size = 0x4, scoped, tag = 'scoped memory for tpu_custom_call.1']
    #allocation7 [shape = 'u8[131072]{0}', space=vmem, size = 0x20000, scoped, tag = 'input window, operand 3, single buffered']
    #allocation8 [shape = 'u8[131072]{0}', space=vmem, size = 0x20000, scoped, tag = 'input window, operand 5, single buffered']
    #allocation9 [shape = 's32[1]{0}', space=sflag, size = 0x4, scoped, tag = 'scoped memory for tpu_custom_call.1']
    #allocation10 [shape = 'u8[131072]{0}', space=vmem, size = 0x20000, scoped, tag = 'input window, operand 7, single buffered']
    #allocation11 [shape = 'u8[65536]{0}', space=vmem, size = 0x10000, scoped, tag = 'input window, operand 9, single buffered']
    #allocation12 [shape = 's32[1]{0}', space=sflag, size = 0x4, scoped, tag = 'scoped memory for tpu_custom_call.1']
    #allocation13 [shape = 'u8[4096]{0}', space=vmem, size = 0x1000, scoped, tag = 'output window, operand 0, single buffered']
    #allocation14 [shape = 'u8[4096]{0}', space=vmem, size = 0x1000, scoped, tag = 'output window, operand 1, single buffered']
    #allocation15 [shape = 's32[1]{0}', space=sflag, size = 0x4, scoped, tag = 'scoped memory for tpu_custom_call.1']
    #allocation16 [shape = 'u8[4096]{0}', space=vmem, size = 0x1000, scoped, tag = 'output window, operand 2, single buffered']
    #allocation17 [shape = 'u8[4096]{0}', space=vmem, size = 0x1000, scoped, tag = 'output window, operand 3, single buffered']
    #allocation18 [shape = 's32[1]{0}', space=sflag, size = 0x4, scoped, tag = 'scoped memory for tpu_custom_call.1']
    #allocation19 [shape = 'u8[4096]{0}', space=vmem, size = 0x1000, scoped, tag = 'output window, operand 4, single buffered']
    %21 = vsyncpa [#allocation3], 0
    %22 = vsyncpa [#allocation6], 0
    %23 = vsyncpa [#allocation9], 0
    %24 = vsyncpa [#allocation12], 0
    %25 = vsyncpa [#allocation4], 0
    %26 = vsyncpa [#allocation15], 0
    %27 = vsyncpa [#allocation18], 0
    // Predicated region
    $region2: #{tpu_custom_call.1} parent=1 // pred_check
      _
    $region3: #{tpu_custom_call.1} parent=1 // pred_check_branch
      %29 = sbr.rel (0) target = $region5
    $region4: #{tpu_custom_call.1} parent=1 // pred_region
      %s31 = ssub.s32 896, 896
      %32 = vsyncadd [#allocation3], %s31
      %s34 = sshll.u32 [#allocation2], 4
      %s35 = int_to_ptr.vmem [resolvable:$true] %s34
      %37 = dma.hbm_to_vmem [thread:$0]  %s0, 896, %s35, [#allocation3]
    $region5: #{tpu_custom_call.1} parent=1 // pred_fallthru
      _
    // Predicated region
    $region6: #{tpu_custom_call.1} parent=1 // pred_check
      _
    $region7: #{tpu_custom_call.1} parent=1 // pred_check_branch
      %39 = sbr.rel (0) target = $region9
    $region8: #{tpu_custom_call.1} parent=1 // pred_region
      %s41 = ssub.s32 12544, 12544
      %42 = vsyncadd [#allocation6], %s41
      %s43 = sshll.u32 [#allocation5], 4
      %s44 = int_to_ptr.vmem [resolvable:$true] %s43
      %49 = dma.hbm_to_vmem [thread:$0]  %s1, 12544, %s44, [#allocation6], 128, 128, 8
    $region9: #{tpu_custom_call.1} parent=1 // pred_fallthru
      _
    // Predicated region
    $region10: #{tpu_custom_call.1} parent=1 // pred_check
      _
    $region11: #{tpu_custom_call.1} parent=1 // pred_check_branch
      %51 = sbr.rel (0) target = $region13
    $region12: #{tpu_custom_call.1} parent=1 // pred_region
      _
    $region13: #{tpu_custom_call.1} parent=1 // pred_fallthru
      _
    // Predicated region
    $region14: #{tpu_custom_call.1} parent=1 // pred_check
      _
    $region15: #{tpu_custom_call.1} parent=1 // pred_check_branch
      %53 = sbr.rel (0) target = $region17
    $region16: #{tpu_custom_call.1} parent=1 // pred_region
      %s55 = ssub.s32 4096, 4096
      %56 = vsyncadd [#allocation6], %s55
      %s57 = sshll.u32 [#allocation7], 4
      %s58 = int_to_ptr.vmem [resolvable:$true] %s57
      %63 = dma.hbm_to_vmem [thread:$0]  %s3, 4096, %s58, [#allocation6], 128, 128, 8
    $region17: #{tpu_custom_call.1} parent=1 // pred_fallthru
      _
    // Predicated region
    $region18: #{tpu_custom_call.1} parent=1 // pred_check
      _
    $region19: #{tpu_custom_call.1} parent=1 // pred_check_branch
      %65 = sbr.rel (0) target = $region21
    $region20: #{tpu_custom_call.1} parent=1 // pred_region
      _
    $region21: #{tpu_custom_call.1} parent=1 // pred_fallthru
      _
    // Predicated region
    $region22: #{tpu_custom_call.1} parent=1 // pred_check
      _
    $region23: #{tpu_custom_call.1} parent=1 // pred_check_branch
      %67 = sbr.rel (0) target = $region25
    $region24: #{tpu_custom_call.1} parent=1 // pred_region
      %s69 = ssub.s32 4096, 4096
      %70 = vsyncadd [#allocation9], %s69
      %s71 = sshll.u32 [#allocation8], 4
      %s72 = int_to_ptr.vmem [resolvable:$true] %s71
      %77 = dma.hbm_to_vmem [thread:$0]  %s5, 4096, %s72, [#allocation9], 128, 128, 8
    $region25: #{tpu_custom_call.1} parent=1 // pred_fallthru
      _
    // Predicated region
    $region26: #{tpu_custom_call.1} parent=1 // pred_check
      _
    $region27: #{tpu_custom_call.1} parent=1 // pred_check_branch
      %79 = sbr.rel (0) target = $region29
    $region28: #{tpu_custom_call.1} parent=1 // pred_region
      _
    $region29: #{tpu_custom_call.1} parent=1 // pred_fallthru
      _
    // Predicated region
    $region30: #{tpu_custom_call.1} parent=1 // pred_check
      _
    $region31: #{tpu_custom_call.1} parent=1 // pred_check_branch
      %81 = sbr.rel (0) target = $region33
    $region32: #{tpu_custom_call.1} parent=1 // pred_region
      %s83 = ssub.s32 4096, 4096
      %84 = vsyncadd [#allocation9], %s83
      %s85 = sshll.u32 [#allocation10], 4
      %s86 = int_to_ptr.vmem [resolvable:$true] %s85
      %91 = dma.hbm_to_vmem [thread:$0]  %s7, 4096, %s86, [#allocation9], 128, 128, 8
    $region33: #{tpu_custom_call.1} parent=1 // pred_fallthru
      _
    // Predicated region
    $region34: #{tpu_custom_call.1} parent=1 // pred_check
      _
    $region35: #{tpu_custom_call.1} parent=1 // pred_check_branch
      %93 = sbr.rel (0) target = $region37
    $region36: #{tpu_custom_call.1} parent=1 // pred_region
      _
    $region37: #{tpu_custom_call.1} parent=1 // pred_fallthru
      _
    // Predicated region
    $region38: #{tpu_custom_call.1} parent=1 // pred_check
      _
    $region39: #{tpu_custom_call.1} parent=1 // pred_check_branch
      %95 = sbr.rel (0) target = $region41
    $region40: #{tpu_custom_call.1} parent=1 // pred_region
      %s97 = ssub.s32 2048, 2048
      %98 = vsyncadd [#allocation12], %s97
      %s99 = sshll.u32 [#allocation11], 4
      %s100 = int_to_ptr.vmem [resolvable:$true] %s99
      %105 = dma.hbm_to_vmem [thread:$0]  %s9, 2048, %s100, [#allocation12], 64, 64, 4
    $region41: #{tpu_custom_call.1} parent=1 // pred_fallthru
      _
    // Predicated region
    $region42: #{tpu_custom_call.1} parent=1 // pred_check
      _
    $region43: #{tpu_custom_call.1} parent=1 // pred_check_branch
      %107 = sbr.rel (0) target = $region45
    $region44: #{tpu_custom_call.1} parent=1 // pred_region
      _
    $region45: #{tpu_custom_call.1} parent=1 // pred_fallthru
      _
    // Predicated region
    $region46: #{tpu_custom_call.1} parent=1 // pred_check
      _
    $region47: #{tpu_custom_call.1} parent=1 // pred_check_branch
      %109 = sbr.rel (0) target = $region49
    $region48: #{tpu_custom_call.1} parent=1 // pred_region
      %110 = dma.done [#allocation3], 896
    $region49: #{tpu_custom_call.1} parent=1 // pred_fallthru
      _
    // Predicated region
    $region50: #{tpu_custom_call.1} parent=1 // pred_check
      _
    $region51: #{tpu_custom_call.1} parent=1 // pred_check_branch
      %112 = sbr.rel (0) target = $region53
    $region52: #{tpu_custom_call.1} parent=1 // pred_region
      %113 = dma.done [#allocation6], 12544
    $region53: #{tpu_custom_call.1} parent=1 // pred_fallthru
      _
    // Predicated region
    $region54: #{tpu_custom_call.1} parent=1 // pred_check
      _
    $region55: #{tpu_custom_call.1} parent=1 // pred_check_branch
      %115 = sbr.rel (0) target = $region57
    $region56: #{tpu_custom_call.1} parent=1 // pred_region
      %116 = dma.done [#allocation6], 4096
    $region57: #{tpu_custom_call.1} parent=1 // pred_fallthru
      _
    // Predicated region
    $region58: #{tpu_custom_call.1} parent=1 // pred_check
      _
    $region59: #{tpu_custom_call.1} parent=1 // pred_check_branch
      %118 = sbr.rel (0) target = $region61
    $region60: #{tpu_custom_call.1} parent=1 // pred_region
      %119 = dma.done [#allocation9], 4096
    $region61: #{tpu_custom_call.1} parent=1 // pred_fallthru
      _
    // Predicated region
    $region62: #{tpu_custom_call.1} parent=1 // pred_check
      _
    $region63: #{tpu_custom_call.1} parent=1 // pred_check_branch
      %121 = sbr.rel (0) target = $region65
    $region64: #{tpu_custom_call.1} parent=1 // pred_region
      %122 = dma.done [#allocation9], 4096
    $region65: #{tpu_custom_call.1} parent=1 // pred_fallthru
      _
    // Predicated region
    $region66: #{tpu_custom_call.1} parent=1 // pred_check
      _
    $region67: #{tpu_custom_call.1} parent=1 // pred_check_branch
      %124 = sbr.rel (0) target = $region69
    $region68: #{tpu_custom_call.1} parent=1 // pred_region
      %125 = dma.done [#allocation12], 2048
    $region69: #{tpu_custom_call.1} parent=1 // pred_fallthru
      _
    %v127 = vld [vmem:[#allocation2] sm:$0xff]
    %v128 = vld [vmem:[#allocation2 + $0x8] sm:$0xff]
    %v129 = vld [vmem:[#allocation2 + $0x10] sm:$0xff]
    %v130 = vld [vmem:[#allocation2 + $0x18] sm:$0xff]
    %v131 = vld [vmem:[#allocation2 + $0x20] sm:$0xff]
    %v132 = vld [vmem:[#allocation2 + $0x28] sm:$0xff]
    %v133 = vld [vmem:[#allocation2 + $0x30] sm:$0xff]
    %v134 = vpack.c.bf16 %v127, %v127
    %v135 = vpack.c.bf16 %v128, %v128
    %v136 = vpack.c.bf16 %v129, %v129
    %v137 = vpack.c.bf16 %v130, %v130
    %v138 = vpack.c.bf16 %v131, %v131
    %v139 = vpack.c.bf16 %v132, %v132
    %v140 = vpack.c.bf16 %v133, %v133
    %v141 = vld [vmem:[#allocation5] sm:$0xff]
    %v142 = vld [vmem:[#allocation5 + $0x8] sm:$0xff]
    %v143 = vld [vmem:[#allocation5 + $0x10] sm:$0xff]
    %v144 = vld [vmem:[#allocation5 + $0x18] sm:$0xff]
    %v145 = vld [vmem:[#allocation5 + $0x20] sm:$0xff]
    %v146 = vld [vmem:[#allocation5 + $0x28] sm:$0xff]
    %v147 = vld [vmem:[#allocation5 + $0x30] sm:$0xff]
    %v148 = vld [vmem:[#allocation5 + $0x38] sm:$0xff]
    %v149 = vld [vmem:[#allocation5 + $0x40] sm:$0xff]
    %v150 = vld [vmem:[#allocation5 + $0x48] sm:$0xff]
    %v151 = vld [vmem:[#allocation5 + $0x50] sm:$0xff]
    %v152 = vld [vmem:[#allocation5 + $0x58] sm:$0xff]
    %v153 = vld [vmem:[#allocation5 + $0x60] sm:$0xff]
    %v154 = vld [vmem:[#allocation5 + $0x68] sm:$0xff]
    %v155 = vld [vmem:[#allocation5 + $0x70] sm:$0xff]
    %v156 = vld [vmem:[#allocation5 + $0x78] sm:$0xff]
    %v157 = vld [vmem:[#allocation5 + $0x80] sm:$0xff]
    %v158 = vld [vmem:[#allocation5 + $0x88] sm:$0xff]
    %v159 = vld [vmem:[#allocation5 + $0x90] sm:$0xff]
    %v160 = vld [vmem:[#allocation5 + $0x98] sm:$0xff]
    %v161 = vld [vmem:[#allocation5 + $0xa0] sm:$0xff]
    %v162 = vld [vmem:[#allocation5 + $0xa8] sm:$0xff]
    %v163 = vld [vmem:[#allocation5 + $0xb0] sm:$0xff]
    %v164 = vld [vmem:[#allocation5 + $0xb8] sm:$0xff]
    %v165 = vld [vmem:[#allocation5 + $0xc0] sm:$0xff]
    %v166 = vld [vmem:[#allocation5 + $0xc8] sm:$0xff]
    %v167 = vld [vmem:[#allocation5 + $0xd0] sm:$0xff]
    %v168 = vld [vmem:[#allocation5 + $0xd8] sm:$0xff]
    %v169 = vld [vmem:[#allocation5 + $0xe0] sm:$0xff]
    %v170 = vld [vmem:[#allocation5 + $0xe8] sm:$0xff]
    %v171 = vld [vmem:[#allocation5 + $0xf0] sm:$0xff]
    %v172 = vld [vmem:[#allocation5 + $0xf8] sm:$0xff]
    %v173 = vld [vmem:[#allocation5 + $0x100] sm:$0xff]
    %v174 = vld [vmem:[#allocation5 + $0x108] sm:$0xff]
    %v175 = vld [vmem:[#allocation5 + $0x110] sm:$0xff]
    %v176 = vld [vmem:[#allocation5 + $0x118] sm:$0xff]
    %v177 = vld [vmem:[#allocation5 + $0x120] sm:$0xff]
    %v178 = vld [vmem:[#allocation5 + $0x128] sm:$0xff]
    %v179 = vld [vmem:[#allocation5 + $0x130] sm:$0xff]
    %v180 = vld [vmem:[#allocation5 + $0x138] sm:$0xff]
    %v181 = vld [vmem:[#allocation5 + $0x140] sm:$0xff]
    %v182 = vld [vmem:[#allocation5 + $0x148] sm:$0xff]
    %v183 = vld [vmem:[#allocation5 + $0x150] sm:$0xff]
    %v184 = vld [vmem:[#allocation5 + $0x158] sm:$0xff]
    %v185 = vld [vmem:[#allocation5 + $0x160] sm:$0xff]
    %v186 = vld [vmem:[#allocation5 + $0x168] sm:$0xff]
    %v187 = vld [vmem:[#allocation5 + $0x170] sm:$0xff]
    %v188 = vld [vmem:[#allocation5 + $0x178] sm:$0xff]
    %v189 = vld [vmem:[#allocation5 + $0x180] sm:$0xff]
    %v190 = vld [vmem:[#allocation5 + $0x188] sm:$0xff]
    %v191 = vld [vmem:[#allocation5 + $0x190] sm:$0xff]
    %v192 = vld [vmem:[#allocation5 + $0x198] sm:$0xff]
    %v193 = vld [vmem:[#allocation5 + $0x1a0] sm:$0xff]
    %v194 = vld [vmem:[#allocation5 + $0x1a8] sm:$0xff]
    %v195 = vld [vmem:[#allocation5 + $0x1b0] sm:$0xff]
    %v196 = vld [vmem:[#allocation5 + $0x1b8] sm:$0xff]
    %v197 = vld [vmem:[#allocation5 + $0x1c0] sm:$0xff]
    %v198 = vld [vmem:[#allocation5 + $0x1c8] sm:$0xff]
    %v199 = vld [vmem:[#allocation5 + $0x1d0] sm:$0xff]
    %v200 = vld [vmem:[#allocation5 + $0x1d8] sm:$0xff]
    %v201 = vld [vmem:[#allocation5 + $0x1e0] sm:$0xff]
    %v202 = vld [vmem:[#allocation5 + $0x1e8] sm:$0xff]
    %v203 = vld [vmem:[#allocation5 + $0x1f0] sm:$0xff]
    %v204 = vld [vmem:[#allocation5 + $0x1f8] sm:$0xff]
    %v205 = vld [vmem:[#allocation5 + $0x200] sm:$0xff]
    %v206 = vld [vmem:[#allocation5 + $0x208] sm:$0xff]
    %v207 = vld [vmem:[#allocation5 + $0x210] sm:$0xff]
    %v208 = vld [vmem:[#allocation5 + $0x218] sm:$0xff]
    %v209 = vld [vmem:[#allocation5 + $0x220] sm:$0xff]
    %v210 = vld [vmem:[#allocation5 + $0x228] sm:$0xff]
    %v211 = vld [vmem:[#allocation5 + $0x230] sm:$0xff]
    %v212 = vld [vmem:[#allocation5 + $0x238] sm:$0xff]
    %v213 = vld [vmem:[#allocation5 + $0x240] sm:$0xff]
    %v214 = vld [vmem:[#allocation5 + $0x248] sm:$0xff]
    %v215 = vld [vmem:[#allocation5 + $0x250] sm:$0xff]
    %v216 = vld [vmem:[#allocation5 + $0x258] sm:$0xff]
    %v217 = vld [vmem:[#allocation5 + $0x260] sm:$0xff]
    %v218 = vld [vmem:[#allocation5 + $0x268] sm:$0xff]
    %v219 = vld [vmem:[#allocation5 + $0x270] sm:$0xff]
    %v220 = vld [vmem:[#allocation5 + $0x278] sm:$0xff]
    %v221 = vld [vmem:[#allocation5 + $0x280] sm:$0xff]
    %v222 = vld [vmem:[#allocation5 + $0x288] sm:$0xff]
    %v223 = vld [vmem:[#allocation5 + $0x290] sm:$0xff]
    %v224 = vld [vmem:[#allocation5 + $0x298] sm:$0xff]
    %v225 = vld [vmem:[#allocation5 + $0x2a0] sm:$0xff]
    %v226 = vld [vmem:[#allocation5 + $0x2a8] sm:$0xff]
    %v227 = vld [vmem:[#allocation5 + $0x2b0] sm:$0xff]
    %v228 = vld [vmem:[#allocation5 + $0x2b8] sm:$0xff]
    %v229 = vld [vmem:[#allocation5 + $0x2c0] sm:$0xff]
    %v230 = vld [vmem:[#allocation5 + $0x2c8] sm:$0xff]
    %v231 = vld [vmem:[#allocation5 + $0x2d0] sm:$0xff]
    %v232 = vld [vmem:[#allocation5 + $0x2d8] sm:$0xff]
    %v233 = vld [vmem:[#allocation5 + $0x2e0] sm:$0xff]
    %v234 = vld [vmem:[#allocation5 + $0x2e8] sm:$0xff]
    %v235 = vld [vmem:[#allocation5 + $0x2f0] sm:$0xff]
    %v236 = vld [vmem:[#allocation5 + $0x2f8] sm:$0xff]
    %v237 = vld [vmem:[#allocation5 + $0x300] sm:$0xff]
    %v238 = vld [vmem:[#allocation5 + $0x308] sm:$0xff]
    %v239 = vld [vmem:[%s2] sm:$0x3]
    %v241 = vlaneseq
    %v242 = vshrl.u32 %v241, 7
    %v243 = vsub.s32 0, %v242
    %v244 = vrot.slane %v239, %v243
    %v245 = vlaneseq
    %v246 = vshrl.u32 %v245, 7
    %v247 = vsub.s32 1, %v246
    %v248 = vrot.slane %v239, %v247
    %v349 = vunpack.c.l.b16 %v141
    %v350 = vunpack.c.h.b16 %v141
    %v351 = vunpack.c.l.b16 %v142
    %v352 = vunpack.c.h.b16 %v142
    %v353 = vunpack.c.l.b16 %v143
    %v354 = vunpack.c.h.b16 %v143
    %v355 = vunpack.c.l.b16 %v144
    %v356 = vunpack.c.h.b16 %v144
    %v357 = vunpack.c.l.b16 %v145
    %v358 = vunpack.c.h.b16 %v145
    %v359 = vunpack.c.l.b16 %v146
    %v360 = vunpack.c.h.b16 %v146
    %v361 = vunpack.c.l.b16 %v147
    %v362 = vunpack.c.h.b16 %v147
    %v363 = vunpack.c.l.b16 %v148
    %v364 = vunpack.c.h.b16 %v148
    %v365 = vunpack.c.l.b16 %v149
    %v366 = vunpack.c.h.b16 %v149
    %v367 = vunpack.c.l.b16 %v150
    %v368 = vunpack.c.h.b16 %v150
    %v369 = vunpack.c.l.b16 %v151
    %v370 = vunpack.c.h.b16 %v151
    %v371 = vunpack.c.l.b16 %v152
    %v372 = vunpack.c.h.b16 %v152
    %v373 = vunpack.c.l.b16 %v153
    %v374 = vunpack.c.h.b16 %v153
    %v375 = vunpack.c.l.b16 %v154
    %v376 = vunpack.c.h.b16 %v154
    %v377 = vunpack.c.l.b16 %v155
    %v378 = vunpack.c.h.b16 %v155
    %v379 = vunpack.c.l.b16 %v156
    %v380 = vunpack.c.h.b16 %v156
    %v381 = vunpack.c.l.b16 %v157
    %v382 = vunpack.c.h.b16 %v157
    %v383 = vunpack.c.l.b16 %v158
    %v384 = vunpack.c.h.b16 %v158
    %v385 = vunpack.c.l.b16 %v159
    %v386 = vunpack.c.h.b16 %v159
    %v387 = vunpack.c.l.b16 %v160
    %v388 = vunpack.c.h.b16 %v160
    %v389 = vunpack.c.l.b16 %v161
    %v390 = vunpack.c.h.b16 %v161
    %v391 = vunpack.c.l.b16 %v162
    %v392 = vunpack.c.h.b16 %v162
    %v393 = vunpack.c.l.b16 %v163
    %v394 = vunpack.c.h.b16 %v163
    %v395 = vunpack.c.l.b16 %v164
    %v396 = vunpack.c.h.b16 %v164
    %v397 = vunpack.c.l.b16 %v165
    %v398 = vunpack.c.h.b16 %v165
    %v399 = vunpack.c.l.b16 %v166
    %v400 = vunpack.c.h.b16 %v166
    %v401 = vunpack.c.l.b16 %v167
    %v402 = vunpack.c.h.b16 %v167
    %v403 = vunpack.c.l.b16 %v168
    %v404 = vunpack.c.h.b16 %v168
    %v405 = vunpack.c.l.b16 %v169
    %v406 = vunpack.c.h.b16 %v169
    %v407 = vunpack.c.l.b16 %v170
    %v408 = vunpack.c.h.b16 %v170
    %v409 = vunpack.c.l.b16 %v171
    %v410 = vunpack.c.h.b16 %v171
    %v411 = vunpack.c.l.b16 %v172
    %v412 = vunpack.c.h.b16 %v172
    %v413 = vunpack.c.l.b16 %v173
    %v414 = vunpack.c.h.b16 %v173
    %v415 = vunpack.c.l.b16 %v174
    %v416 = vunpack.c.h.b16 %v174
    %v417 = vunpack.c.l.b16 %v175
    %v418 = vunpack.c.h.b16 %v175
    %v419 = vunpack.c.l.b16 %v176
    %v420 = vunpack.c.h.b16 %v176
    %v421 = vunpack.c.l.b16 %v177
    %v422 = vunpack.c.h.b16 %v177
    %v423 = vunpack.c.l.b16 %v178
    %v424 = vunpack.c.h.b16 %v178
    %v425 = vunpack.c.l.b16 %v179
    %v426 = vunpack.c.h.b16 %v179
    %v427 = vunpack.c.l.b16 %v180
    %v428 = vunpack.c.h.b16 %v180
    %v429 = vunpack.c.l.b16 %v181
    %v430 = vunpack.c.h.b16 %v181
    %v431 = vunpack.c.l.b16 %v182
    %v432 = vunpack.c.h.b16 %v182
    %v433 = vunpack.c.l.b16 %v183
    %v434 = vunpack.c.h.b16 %v183
    %v435 = vunpack.c.l.b16 %v184
    %v436 = vunpack.c.h.b16 %v184
    %v437 = vunpack.c.l.b16 %v185
    %v438 = vunpack.c.h.b16 %v185
    %v439 = vunpack.c.l.b16 %v186
    %v440 = vunpack.c.h.b16 %v186
    %v441 = vunpack.c.l.b16 %v187
    %v442 = vunpack.c.h.b16 %v187
    %v443 = vunpack.c.l.b16 %v188
    %v444 = vunpack.c.h.b16 %v188
    %v445 = vunpack.c.l.b16 %v189
    %v446 = vunpack.c.h.b16 %v189
    %v447 = vunpack.c.l.b16 %v190
    %v448 = vunpack.c.h.b16 %v190
    %v449 = vunpack.c.l.b16 %v191
    %v450 = vunpack.c.h.b16 %v191
    %v451 = vunpack.c.l.b16 %v192
    %v452 = vunpack.c.h.b16 %v192
    %v453 = vunpack.c.l.b16 %v193
    %v454 = vunpack.c.h.b16 %v193
    %v455 = vunpack.c.l.b16 %v194
    %v456 = vunpack.c.h.b16 %v194
    %v457 = vunpack.c.l.b16 %v195
    %v458 = vunpack.c.h.b16 %v195
    %v459 = vunpack.c.l.b16 %v196
    %v460 = vunpack.c.h.b16 %v196
    %v461 = vunpack.c.l.b16 %v197
    %v462 = vunpack.c.h.b16 %v197
    %v463 = vunpack.c.l.b16 %v198
    %v464 = vunpack.c.h.b16 %v198
    %v465 = vunpack.c.l.b16 %v199
    %v466 = vunpack.c.h.b16 %v199
    %v467 = vunpack.c.l.b16 %v200
    %v468 = vunpack.c.h.b16 %v200
    %v469 = vunpack.c.l.b16 %v201
    %v470 = vunpack.c.h.b16 %v201
    %v471 = vunpack.c.l.b16 %v202
    %v472 = vunpack.c.h.b16 %v202
    %v473 = vunpack.c.l.b16 %v203
    %v474 = vunpack.c.h.b16 %v203
    %v475 = vunpack.c.l.b16 %v204
    %v476 = vunpack.c.h.b16 %v204
    %v477 = vunpack.c.l.b16 %v205
    %v478 = vunpack.c.h.b16 %v205
    %v479 = vunpack.c.l.b16 %v206
    %v480 = vunpack.c.h.b16 %v206
    %v481 = vunpack.c.l.b16 %v207
    %v482 = vunpack.c.h.b16 %v207
    %v483 = vunpack.c.l.b16 %v208
    %v484 = vunpack.c.h.b16 %v208
    %v485 = vunpack.c.l.b16 %v209
    %v486 = vunpack.c.h.b16 %v209
    %v487 = vunpack.c.l.b16 %v210
    %v488 = vunpack.c.h.b16 %v210
    %v489 = vunpack.c.l.b16 %v211
    %v490 = vunpack.c.h.b16 %v211
    %v491 = vunpack.c.l.b16 %v212
    %v492 = vunpack.c.h.b16 %v212
    %v493 = vunpack.c.l.b16 %v213
    %v494 = vunpack.c.h.b16 %v213
    %v495 = vunpack.c.l.b16 %v214
    %v496 = vunpack.c.h.b16 %v214
    %v497 = vunpack.c.l.b16 %v215
    %v498 = vunpack.c.h.b16 %v215
    %v499 = vunpack.c.l.b16 %v216
    %v500 = vunpack.c.h.b16 %v216
    %v501 = vunpack.c.l.b16 %v217
    %v502 = vunpack.c.h.b16 %v217
    %v503 = vunpack.c.l.b16 %v218
    %v504 = vunpack.c.h.b16 %v218
    %v505 = vunpack.c.l.b16 %v219
    %v506 = vunpack.c.h.b16 %v219
    %v507 = vunpack.c.l.b16 %v220
    %v508 = vunpack.c.h.b16 %v220
    %v509 = vunpack.c.l.b16 %v221
    %v510 = vunpack.c.h.b16 %v221
    %v511 = vunpack.c.l.b16 %v222
    %v512 = vunpack.c.h.b16 %v222
    %v513 = vunpack.c.l.b16 %v223
    %v514 = vunpack.c.h.b16 %v223
    %v515 = vunpack.c.l.b16 %v224
    %v516 = vunpack.c.h.b16 %v224
    %v517 = vunpack.c.l.b16 %v225
    %v518 = vunpack.c.h.b16 %v225
    %v519 = vunpack.c.l.b16 %v226
    %v520 = vunpack.c.h.b16 %v226
    %v521 = vunpack.c.l.b16 %v227
    %v522 = vunpack.c.h.b16 %v227
    %v523 = vunpack.c.l.b16 %v228
    %v524 = vunpack.c.h.b16 %v228
    %v525 = vunpack.c.l.b16 %v229
    %v526 = vunpack.c.h.b16 %v229
    %v527 = vunpack.c.l.b16 %v230
    %v528 = vunpack.c.h.b16 %v230
    %v529 = vunpack.c.l.b16 %v231
    %v530 = vunpack.c.h.b16 %v231
    %v531 = vunpack.c.l.b16 %v232
    %v532 = vunpack.c.h.b16 %v232
    %v533 = vunpack.c.l.b16 %v233
    %v534 = vunpack.c.h.b16 %v233
    %v535 = vunpack.c.l.b16 %v234
    %v536 = vunpack.c.h.b16 %v234
    %v537 = vunpack.c.l.b16 %v235
    %v538 = vunpack.c.h.b16 %v235
    %v539 = vunpack.c.l.b16 %v236
    %v540 = vunpack.c.h.b16 %v236
    %v541 = vunpack.c.l.b16 %v237
    %v542 = vunpack.c.h.b16 %v237
    %v543 = vunpack.c.l.b16 %v238
    %v544 = vunpack.c.h.b16 %v238
    %v545 = vpack.c.b16 %v351, %v349
    %v546 = vpack.c.b16 %v352, %v350
    %v547 = vpack.c.b16 %v355, %v353
    %v548 = vpack.c.b16 %v356, %v354
    %v549 = vpack.c.b16 %v359, %v357
    %v550 = vpack.c.b16 %v360, %v358
    %v551 = vpack.c.b16 %v363, %v361
    %v552 = vpack.c.b16 %v364, %v362
    %v553 = vpack.c.b16 %v367, %v365
    %v554 = vpack.c.b16 %v368, %v366
    %v555 = vpack.c.b16 %v371, %v369
    %v556 = vpack.c.b16 %v372, %v370
    %v557 = vpack.c.b16 %v375, %v373
    %v558 = vpack.c.b16 %v376, %v374
    %v559 = vpack.c.b16 %v379, %v377
    %v560 = vpack.c.b16 %v380, %v378
    %v561 = vpack.c.b16 %v383, %v381
    %v562 = vpack.c.b16 %v384, %v382
    %v563 = vpack.c.b16 %v387, %v385
    %v564 = vpack.c.b16 %v388, %v386
    %v565 = vpack.c.b16 %v391, %v389
    %v566 = vpack.c.b16 %v392, %v390
    %v567 = vpack.c.b16 %v395, %v393
    %v568 = vpack.c.b16 %v396, %v394
    %v569 = vpack.c.b16 %v399, %v397
    %v570 = vpack.c.b16 %v400, %v398
    %v571 = vpack.c.b16 %v403, %v401
    %v572 = vpack.c.b16 %v404, %v402
    %v573 = vpack.c.b16 %v407, %v405
    %v574 = vpack.c.b16 %v408, %v406
    %v575 = vpack.c.b16 %v411, %v409
    %v576 = vpack.c.b16 %v412, %v410
    %v577 = vpack.c.b16 %v415, %v413
    %v578 = vpack.c.b16 %v416, %v414
    %v579 = vpack.c.b16 %v419, %v417
    %v580 = vpack.c.b16 %v420, %v418
    %v581 = vpack.c.b16 %v423, %v421
    %v582 = vpack.c.b16 %v424, %v422
    %v583 = vpack.c.b16 %v427, %v425
    %v584 = vpack.c.b16 %v428, %v426
    %v585 = vpack.c.b16 %v431, %v429
    %v586 = vpack.c.b16 %v432, %v430
    %v587 = vpack.c.b16 %v435, %v433
    %v588 = vpack.c.b16 %v436, %v434
    %v589 = vpack.c.b16 %v439, %v437
    %v590 = vpack.c.b16 %v440, %v438
    %v591 = vpack.c.b16 %v443, %v441
    %v592 = vpack.c.b16 %v444, %v442
    %v593 = vpack.c.b16 %v447, %v445
    %v594 = vpack.c.b16 %v448, %v446
    %v595 = vpack.c.b16 %v451, %v449
    %v596 = vpack.c.b16 %v452, %v450
    %v597 = vpack.c.b16 %v455, %v453
    %v598 = vpack.c.b16 %v456, %v454
    %v599 = vpack.c.b16 %v459, %v457
    %v600 = vpack.c.b16 %v460, %v458
    %v601 = vpack.c.b16 %v463, %v461
    %v602 = vpack.c.b16 %v464, %v462
    %v603 = vpack.c.b16 %v467, %v465
    %v604 = vpack.c.b16 %v468, %v466
    %v605 = vpack.c.b16 %v471, %v469
    %v606 = vpack.c.b16 %v472, %v470
    %v607 = vpack.c.b16 %v475, %v473
    %v608 = vpack.c.b16 %v476, %v474
    %v609 = vpack.c.b16 %v479, %v477
    %v610 = vpack.c.b16 %v480, %v478
    %v611 = vpack.c.b16 %v483, %v481
    %v612 = vpack.c.b16 %v484, %v482
    %v613 = vpack.c.b16 %v487, %v485
    %v614 = vpack.c.b16 %v488, %v486
    %v615 = vpack.c.b16 %v491, %v489
    %v616 = vpack.c.b16 %v492, %v490
    %v617 = vpack.c.b16 %v495, %v493
    %v618 = vpack.c.b16 %v496, %v494
    %v619 = vpack.c.b16 %v499, %v497
    %v620 = vpack.c.b16 %v500, %v498
    %v621 = vpack.c.b16 %v503, %v501
    %v622 = vpack.c.b16 %v504, %v502
    %v623 = vpack.c.b16 %v507, %v505
    %v624 = vpack.c.b16 %v508, %v506
    %v625 = vpack.c.b16 %v511, %v509
    %v626 = vpack.c.b16 %v512, %v510
    %v627 = vpack.c.b16 %v515, %v513
    %v628 = vpack.c.b16 %v516, %v514
    %v629 = vpack.c.b16 %v519, %v517
    %v630 = vpack.c.b16 %v520, %v518
    %v631 = vpack.c.b16 %v523, %v521
    %v632 = vpack.c.b16 %v524, %v522
    %v633 = vpack.c.b16 %v527, %v525
    %v634 = vpack.c.b16 %v528, %v526
    %v635 = vpack.c.b16 %v531, %v529
    %v636 = vpack.c.b16 %v532, %v530
    %v637 = vpack.c.b16 %v535, %v533
    %v638 = vpack.c.b16 %v536, %v534
    %v639 = vpack.c.b16 %v539, %v537
    %v640 = vpack.c.b16 %v540, %v538
    %v641 = vpack.c.b16 %v543, %v541
    %v642 = vpack.c.b16 %v544, %v542
    %vm741 = vcmask 130048
    %v743 = vsel %vm741, %v140, 0
    %745 = vmatprep.subr.bf16.mxu0 %v560
    %746 = vmatpush1.bf16.msra.mxu0 %v559
    %747 = vmatprep.subr.bf16.mxu0 %v558
    %748 = vmatpush1.bf16.msra.mxu0 %v557
    %749 = vmatprep.subr.bf16.mxu0 %v556
    %750 = vmatpush1.bf16.msra.mxu0 %v555
    %751 = vmatprep.subr.bf16.mxu0 %v554
    %752 = vmatpush1.bf16.msra.mxu0 %v553
    %753 = vmatprep.subr.bf16.mxu0 %v552
    %754 = vmatpush1.bf16.msra.mxu0 %v551
    %755 = vmatprep.subr.bf16.mxu0 %v550
    %756 = vmatpush1.bf16.msra.mxu0 %v549
    %757 = vmatprep.subr.bf16.mxu0 %v548
    %758 = vmatpush1.bf16.msra.mxu0 %v547
    %759 = vmatprep.subr.bf16.mxu0 %v546
    %760 = vmatpush1.bf16.msra.mxu0 %v545
    %761 = vmatprep.subr.bf16.mxu0 %v576
    %762 = vmatpush2.bf16.msra.mxu0 %v575
    %763 = vmatprep.subr.bf16.mxu0 %v574
    %764 = vmatpush2.bf16.msra.mxu0 %v573
    %765 = vmatprep.subr.bf16.mxu0 %v572
    %766 = vmatpush2.bf16.msra.mxu0 %v571
    %767 = vmatprep.subr.bf16.mxu0 %v570
    %768 = vmatpush2.bf16.msra.mxu0 %v569
    %769 = vmatprep.subr.bf16.mxu0 %v568
    %770 = vmatpush2.bf16.msra.mxu0 %v567
    %771 = vmatprep.subr.bf16.mxu0 %v566
    %772 = vmatpush2.bf16.msra.mxu0 %v565
    %773 = vmatprep.subr.bf16.mxu0 %v564
    %774 = vmatpush2.bf16.msra.mxu0 %v563
    %775 = vmatprep.subr.bf16.mxu0 %v562
    %776 = vmatpush2.bf16.msra.mxu0 %v561
    %777 = vmatprep.mubr.bf16.mxu0 %v135
    %778 = vmatmul.mubr.bf16.gmra.mxu0 %v134
    %v779 = vpop.f32.mrf.mxu0
    %v780 = vadd.f32 %v244, %v779
    %v781 = vpop.f32.mrf.mxu0
    %v782 = vadd.f32 %v248, %v781
    %v783 = vpop.f32.mrf.mxu0
    %v784 = vpop.f32.mrf.mxu0
    %785 = vdwg.mxu0
    %786 = vmatprep.subr.bf16.mxu0 %v592
    %787 = vmatpush1.bf16.msra.mxu0 %v591
    %788 = vmatprep.subr.bf16.mxu0 %v590
    %789 = vmatpush1.bf16.msra.mxu0 %v589
    %790 = vmatprep.subr.bf16.mxu0 %v588
    %791 = vmatpush1.bf16.msra.mxu0 %v587
    %792 = vmatprep.subr.bf16.mxu0 %v586
    %793 = vmatpush1.bf16.msra.mxu0 %v585
    %794 = vmatprep.subr.bf16.mxu0 %v584
    %795 = vmatpush1.bf16.msra.mxu0 %v583
    %796 = vmatprep.subr.bf16.mxu0 %v582
    %797 = vmatpush1.bf16.msra.mxu0 %v581
    %798 = vmatprep.subr.bf16.mxu0 %v580
    %799 = vmatpush1.bf16.msra.mxu0 %v579
    %800 = vmatprep.subr.bf16.mxu0 %v578
    %801 = vmatpush1.bf16.msra.mxu0 %v577
    %802 = vmatprep.subr.bf16.mxu0 %v608
    %803 = vmatpush2.bf16.msra.mxu0 %v607
    %804 = vmatprep.subr.bf16.mxu0 %v606
    %805 = vmatpush2.bf16.msra.mxu0 %v605
    %806 = vmatprep.subr.bf16.mxu0 %v604
    %807 = vmatpush2.bf16.msra.mxu0 %v603
    %808 = vmatprep.subr.bf16.mxu0 %v602
    %809 = vmatpush2.bf16.msra.mxu0 %v601
    %810 = vmatprep.subr.bf16.mxu0 %v600
    %811 = vmatpush2.bf16.msra.mxu0 %v599
    %812 = vmatprep.subr.bf16.mxu0 %v598
    %813 = vmatpush2.bf16.msra.mxu0 %v597
    %814 = vmatprep.subr.bf16.mxu0 %v596
    %815 = vmatpush2.bf16.msra.mxu0 %v595
    %816 = vmatprep.subr.bf16.mxu0 %v594
    %817 = vmatpush2.bf16.msra.mxu0 %v593
    %818 = vmatprep.mubr.bf16.mxu0 %v137
    %819 = vmatmul.mubr.bf16.gmra.mxu0 %v136
    %v820 = vpop.f32.mrf.mxu0
    %v821 = vadd.f32 %v780, %v820
    %v822 = vpop.f32.mrf.mxu0
    %v823 = vadd.f32 %v782, %v822
    %v824 = vpop.f32.mrf.mxu0
    %v825 = vpop.f32.mrf.mxu0
    %826 = vdwg.mxu0
    %827 = vmatprep.subr.bf16.mxu0 %v624
    %828 = vmatpush1.bf16.msra.mxu0 %v623
    %829 = vmatprep.subr.bf16.mxu0 %v622
    %830 = vmatpush1.bf16.msra.mxu0 %v621
    %831 = vmatprep.subr.bf16.mxu0 %v620
    %832 = vmatpush1.bf16.msra.mxu0 %v619
    %833 = vmatprep.subr.bf16.mxu0 %v618
    %834 = vmatpush1.bf16.msra.mxu0 %v617
    %835 = vmatprep.subr.bf16.mxu0 %v616
    %836 = vmatpush1.bf16.msra.mxu0 %v615
    %837 = vmatprep.subr.bf16.mxu0 %v614
    %838 = vmatpush1.bf16.msra.mxu0 %v613
    %839 = vmatprep.subr.bf16.mxu0 %v612
    %840 = vmatpush1.bf16.msra.mxu0 %v611
    %841 = vmatprep.subr.bf16.mxu0 %v610
    %842 = vmatpush1.bf16.msra.mxu0 %v609
    %843 = vmatprep.subr.bf16.mxu0 %v640
    %844 = vmatpush2.bf16.msra.mxu0 %v639
    %845 = vmatprep.subr.bf16.mxu0 %v638
    %846 = vmatpush2.bf16.msra.mxu0 %v637
    %847 = vmatprep.subr.bf16.mxu0 %v636
    %848 = vmatpush2.bf16.msra.mxu0 %v635
    %849 = vmatprep.subr.bf16.mxu0 %v634
    %850 = vmatpush2.bf16.msra.mxu0 %v633
    %851 = vmatprep.subr.bf16.mxu0 %v632
    %852 = vmatpush2.bf16.msra.mxu0 %v631
    %853 = vmatprep.subr.bf16.mxu0 %v630
    %854 = vmatpush2.bf16.msra.mxu0 %v629
    %855 = vmatprep.subr.bf16.mxu0 %v628
    %856 = vmatpush2.bf16.msra.mxu0 %v627
    %857 = vmatprep.subr.bf16.mxu0 %v626
    %858 = vmatpush2.bf16.msra.mxu0 %v625
    %859 = vmatprep.mubr.bf16.mxu0 %v139
    %860 = vmatmul.mubr.bf16.gmra.mxu0 %v138
    %v861 = vpop.f32.mrf.mxu0
    %v862 = vadd.f32 %v821, %v861
    %v863 = vpop.f32.mrf.mxu0
    %v864 = vadd.f32 %v823, %v863
    %v865 = vpop.f32.mrf.mxu0
    %v866 = vpop.f32.mrf.mxu0
    %867 = vdwg.mxu0
    %868 = vmatprep.subr.bf16.mxu0 0
    %869 = vmatpush1.bf16.msra.mxu0 0
    %870 = vmatprep.subr.bf16.mxu0 0
    %871 = vmatpush1.bf16.msra.mxu0 0
    %872 = vmatprep.subr.bf16.mxu0 0
    %873 = vmatpush1.bf16.msra.mxu0 0
    %874 = vmatprep.subr.bf16.mxu0 0
    %875 = vmatpush1.bf16.msra.mxu0 0
    %876 = vmatprep.subr.bf16.mxu0 0
    %877 = vmatpush1.bf16.msra.mxu0 0
    %878 = vmatprep.subr.bf16.mxu0 0
    %879 = vmatpush1.bf16.msra.mxu0 0
    %880 = vmatprep.subr.bf16.mxu0 0
    %881 = vmatpush1.bf16.msra.mxu0 0
    %882 = vmatprep.subr.bf16.mxu0 %v642
    %883 = vmatpush1.bf16.msra.mxu0 %v641
    %884 = vmatprep.subr.bf16.mxu0 0
    %885 = vmatpush2.bf16.msra.mxu0 0
    %886 = vmatprep.subr.bf16.mxu0 0
    %887 = vmatpush2.bf16.msra.mxu0 0
    %888 = vmatprep.subr.bf16.mxu0 0
    %889 = vmatpush2.bf16.msra.mxu0 0
    %890 = vmatprep.subr.bf16.mxu0 0
    %891 = vmatpush2.bf16.msra.mxu0 0
    %892 = vmatprep.subr.bf16.mxu0 0
    %893 = vmatpush2.bf16.msra.mxu0 0
    %894 = vmatprep.subr.bf16.mxu0 0
    %895 = vmatpush2.bf16.msra.mxu0 0
    %896 = vmatprep.subr.bf16.mxu0 0
    %897 = vmatpush2.bf16.msra.mxu0 0
    %898 = vmatprep.subr.bf16.mxu0 0
    %899 = vmatpush2.bf16.msra.mxu0 0
    %900 = vmatprep.mubr.bf16.mxu0 0
    %901 = vmatmul.mubr.bf16.gmra.mxu0 %v743
    %v902 = vpop.f32.mrf.mxu0
    %v903 = vadd.f32 %v862, %v902
    %v904 = vpop.f32.mrf.mxu0
    %v905 = vadd.f32 %v864, %v904
    %v906 = vpop.f32.mrf.mxu0
    %v907 = vpop.f32.mrf.mxu0
    %908 = vdwg.mxu0
    %v909 = vxor.u32 %v903, 2147483648
    %v910 = vxor.u32 %v905, 2147483648
    %v911 = vmul.f32 %v909, 1.442695
    %v912 = vpow.pop %v911
    %v913 = vmul.f32 %v910, 1.442695
    %v914 = vpow.pop %v913
    %v915 = vadd.f32 %v912, 1.0
    %v916 = vadd.f32 %v914, 1.0
    %v917 = vrcp.pop %v915
    %v918 = vmul.f32 1.0, %v917
    %v919 = vrcp.pop %v916
    %v920 = vmul.f32 1.0, %v919
    %v921 = vpack.c.bf16 %v918, %v918
    %v922 = vpack.c.bf16 %v920, %v920
    %v925 = vunpack.c.l.b16 %v921
    %v926 = vunpack.c.l.b16 %v922
    %v927 = vpack.c.b16 %v926, %v925
    %929 = vst [vmem:[#allocation14] sm:$0xff] %v927
    %v930 = vld [vmem:[#allocation7] sm:$0xff]
    %v931 = vld [vmem:[#allocation7 + $0x8] sm:$0xff]
    %v932 = vld [vmem:[#allocation7 + $0x10] sm:$0xff]
    %v933 = vld [vmem:[#allocation7 + $0x18] sm:$0xff]
    %v934 = vld [vmem:[#allocation7 + $0x20] sm:$0xff]
    %v935 = vld [vmem:[#allocation7 + $0x28] sm:$0xff]
    %v936 = vld [vmem:[#allocation7 + $0x30] sm:$0xff]
    %v937 = vld [vmem:[#allocation7 + $0x38] sm:$0xff]
    %v938 = vld [vmem:[#allocation7 + $0x40] sm:$0xff]
    %v939 = vld [vmem:[#allocation7 + $0x48] sm:$0xff]
    %v940 = vld [vmem:[#allocation7 + $0x50] sm:$0xff]
    %v941 = vld [vmem:[#allocation7 + $0x58] sm:$0xff]
    %v942 = vld [vmem:[#allocation7 + $0x60] sm:$0xff]
    %v943 = vld [vmem:[#allocation7 + $0x68] sm:$0xff]
    %v944 = vld [vmem:[#allocation7 + $0x70] sm:$0xff]
    %v945 = vld [vmem:[#allocation7 + $0x78] sm:$0xff]
    %v946 = vld [vmem:[#allocation7 + $0x80] sm:$0xff]
    %v947 = vld [vmem:[#allocation7 + $0x88] sm:$0xff]
    %v948 = vld [vmem:[#allocation7 + $0x90] sm:$0xff]
    %v949 = vld [vmem:[#allocation7 + $0x98] sm:$0xff]
    %v950 = vld [vmem:[#allocation7 + $0xa0] sm:$0xff]
    %v951 = vld [vmem:[#allocation7 + $0xa8] sm:$0xff]
    %v952 = vld [vmem:[#allocation7 + $0xb0] sm:$0xff]
    %v953 = vld [vmem:[#allocation7 + $0xb8] sm:$0xff]
    %v954 = vld [vmem:[#allocation7 + $0xc0] sm:$0xff]
    %v955 = vld [vmem:[#allocation7 + $0xc8] sm:$0xff]
    %v956 = vld [vmem:[#allocation7 + $0xd0] sm:$0xff]
    %v957 = vld [vmem:[#allocation7 + $0xd8] sm:$0xff]
    %v958 = vld [vmem:[#allocation7 + $0xe0] sm:$0xff]
    %v959 = vld [vmem:[#allocation7 + $0xe8] sm:$0xff]
    %v960 = vld [vmem:[#allocation7 + $0xf0] sm:$0xff]
    %v961 = vld [vmem:[#allocation7 + $0xf8] sm:$0xff]
    %v962 = vld [vmem:[%s4] sm:$0x3]
    %v964 = vlaneseq
    %v965 = vshrl.u32 %v964, 7
    %v966 = vsub.s32 0, %v965
    %v967 = vrot.slane %v962, %v966
    %v968 = vlaneseq
    %v969 = vshrl.u32 %v968, 7
    %v970 = vsub.s32 1, %v969
    %v971 = vrot.slane %v962, %v970
    %v1006 = vunpack.c.l.b16 %v930
    %v1007 = vunpack.c.h.b16 %v930
    %v1008 = vunpack.c.l.b16 %v931
    %v1009 = vunpack.c.h.b16 %v931
    %v1010 = vunpack.c.l.b16 %v932
    %v1011 = vunpack.c.h.b16 %v932
    %v1012 = vunpack.c.l.b16 %v933
    %v1013 = vunpack.c.h.b16 %v933
    %v1014 = vunpack.c.l.b16 %v934
    %v1015 = vunpack.c.h.b16 %v934
    %v1016 = vunpack.c.l.b16 %v935
    %v1017 = vunpack.c.h.b16 %v935
    %v1018 = vunpack.c.l.b16 %v936
    %v1019 = vunpack.c.h.b16 %v936
    %v1020 = vunpack.c.l.b16 %v937
    %v1021 = vunpack.c.h.b16 %v937
    %v1022 = vunpack.c.l.b16 %v938
    %v1023 = vunpack.c.h.b16 %v938
    %v1024 = vunpack.c.l.b16 %v939
    %v1025 = vunpack.c.h.b16 %v939
    %v1026 = vunpack.c.l.b16 %v940
    %v1027 = vunpack.c.h.b16 %v940
    %v1028 = vunpack.c.l.b16 %v941
    %v1029 = vunpack.c.h.b16 %v941
    %v1030 = vunpack.c.l.b16 %v942
    %v1031 = vunpack.c.h.b16 %v942
    %v1032 = vunpack.c.l.b16 %v943
    %v1033 = vunpack.c.h.b16 %v943
    %v1034 = vunpack.c.l.b16 %v944
    %v1035 = vunpack.c.h.b16 %v944
    %v1036 = vunpack.c.l.b16 %v945
    %v1037 = vunpack.c.h.b16 %v945
    %v1038 = vunpack.c.l.b16 %v946
    %v1039 = vunpack.c.h.b16 %v946
    %v1040 = vunpack.c.l.b16 %v947
    %v1041 = vunpack.c.h.b16 %v947
    %v1042 = vunpack.c.l.b16 %v948
    %v1043 = vunpack.c.h.b16 %v948
    %v1044 = vunpack.c.l.b16 %v949
    %v1045 = vunpack.c.h.b16 %v949
    %v1046 = vunpack.c.l.b16 %v950
    %v1047 = vunpack.c.h.b16 %v950
    %v1048 = vunpack.c.l.b16 %v951
    %v1049 = vunpack.c.h.b16 %v951
    %v1050 = vunpack.c.l.b16 %v952
    %v1051 = vunpack.c.h.b16 %v952
    %v1052 = vunpack.c.l.b16 %v953
    %v1053 = vunpack.c.h.b16 %v953
    %v1054 = vunpack.c.l.b16 %v954
    %v1055 = vunpack.c.h.b16 %v954
    %v1056 = vunpack.c.l.b16 %v955
    %v1057 = vunpack.c.h.b16 %v955
    %v1058 = vunpack.c.l.b16 %v956
    %v1059 = vunpack.c.h.b16 %v956
    %v1060 = vunpack.c.l.b16 %v957
    %v1061 = vunpack.c.h.b16 %v957
    %v1062 = vunpack.c.l.b16 %v958
    %v1063 = vunpack.c.h.b16 %v958
    %v1064 = vunpack.c.l.b16 %v959
    %v1065 = vunpack.c.h.b16 %v959
    %v1066 = vunpack.c.l.b16 %v960
    %v1067 = vunpack.c.h.b16 %v960
    %v1068 = vunpack.c.l.b16 %v961
    %v1069 = vunpack.c.h.b16 %v961
    %v1070 = vpack.c.b16 %v1008, %v1006
    %v1071 = vpack.c.b16 %v1009, %v1007
    %v1072 = vpack.c.b16 %v1012, %v1010
    %v1073 = vpack.c.b16 %v1013, %v1011
    %v1074 = vpack.c.b16 %v1016, %v1014
    %v1075 = vpack.c.b16 %v1017, %v1015
    %v1076 = vpack.c.b16 %v1020, %v1018
    %v1077 = vpack.c.b16 %v1021, %v1019
    %v1078 = vpack.c.b16 %v1024, %v1022
    %v1079 = vpack.c.b16 %v1025, %v1023
    %v1080 = vpack.c.b16 %v1028, %v1026
    %v1081 = vpack.c.b16 %v1029, %v1027
    %v1082 = vpack.c.b16 %v1032, %v1030
    %v1083 = vpack.c.b16 %v1033, %v1031
    %v1084 = vpack.c.b16 %v1036, %v1034
    %v1085 = vpack.c.b16 %v1037, %v1035
    %v1086 = vpack.c.b16 %v1040, %v1038
    %v1087 = vpack.c.b16 %v1041, %v1039
    %v1088 = vpack.c.b16 %v1044, %v1042
    %v1089 = vpack.c.b16 %v1045, %v1043
    %v1090 = vpack.c.b16 %v1048, %v1046
    %v1091 = vpack.c.b16 %v1049, %v1047
    %v1092 = vpack.c.b16 %v1052, %v1050
    %v1093 = vpack.c.b16 %v1053, %v1051
    %v1094 = vpack.c.b16 %v1056, %v1054
    %v1095 = vpack.c.b16 %v1057, %v1055
    %v1096 = vpack.c.b16 %v1060, %v1058
    %v1097 = vpack.c.b16 %v1061, %v1059
    %v1098 = vpack.c.b16 %v1064, %v1062
    %v1099 = vpack.c.b16 %v1065, %v1063
    %v1100 = vpack.c.b16 %v1068, %v1066
    %v1101 = vpack.c.b16 %v1069, %v1067
    %1134 = vmatprep.subr.bf16.mxu0 %v1085
    %1135 = vmatpush1.bf16.msra.mxu0 %v1084
    %1136 = vmatprep.subr.bf16.mxu0 %v1083
    %1137 = vmatpush1.bf16.msra.mxu0 %v1082
    %1138 = vmatprep.subr.bf16.mxu0 %v1081
    %1139 = vmatpush1.bf16.msra.mxu0 %v1080
    %1140 = vmatprep.subr.bf16.mxu0 %v1079
    %1141 = vmatpush1.bf16.msra.mxu0 %v1078
    %1142 = vmatprep.subr.bf16.mxu0 %v1077
    %1143 = vmatpush1.bf16.msra.mxu0 %v1076
    %1144 = vmatprep.subr.bf16.mxu0 %v1075
    %1145 = vmatpush1.bf16.msra.mxu0 %v1074
    %1146 = vmatprep.subr.bf16.mxu0 %v1073
    %1147 = vmatpush1.bf16.msra.mxu0 %v1072
    %1148 = vmatprep.subr.bf16.mxu0 %v1071
    %1149 = vmatpush1.bf16.msra.mxu0 %v1070
    %1150 = vmatprep.subr.bf16.mxu0 %v1101
    %1151 = vmatpush2.bf16.msra.mxu0 %v1100
    %1152 = vmatprep.subr.bf16.mxu0 %v1099
    %1153 = vmatpush2.bf16.msra.mxu0 %v1098
    %1154 = vmatprep.subr.bf16.mxu0 %v1097
    %1155 = vmatpush2.bf16.msra.mxu0 %v1096
    %1156 = vmatprep.subr.bf16.mxu0 %v1095
    %1157 = vmatpush2.bf16.msra.mxu0 %v1094
    %1158 = vmatprep.subr.bf16.mxu0 %v1093
    %1159 = vmatpush2.bf16.msra.mxu0 %v1092
    %1160 = vmatprep.subr.bf16.mxu0 %v1091
    %1161 = vmatpush2.bf16.msra.mxu0 %v1090
    %1162 = vmatprep.subr.bf16.mxu0 %v1089
    %1163 = vmatpush2.bf16.msra.mxu0 %v1088
    %1164 = vmatprep.subr.bf16.mxu0 %v1087
    %1165 = vmatpush2.bf16.msra.mxu0 %v1086
    %1166 = vmatprep.mubr.bf16.mxu0 %v922
    %1167 = vmatmul.mubr.bf16.gmra.mxu0 %v921
    %v1168 = vpop.f32.mrf.mxu0
    %v1169 = vadd.f32 %v967, %v1168
    %v1170 = vpop.f32.mrf.mxu0
    %v1171 = vadd.f32 %v971, %v1170
    %v1172 = vpop.f32.mrf.mxu0
    %v1173 = vpop.f32.mrf.mxu0
    %1174 = vdwg.mxu0
    %v1175 = vxor.u32 %v1169, 2147483648
    %v1176 = vxor.u32 %v1171, 2147483648
    %v1177 = vmul.f32 %v1175, 1.442695
    %v1178 = vpow.pop %v1177
    %v1179 = vmul.f32 %v1176, 1.442695
    %v1180 = vpow.pop %v1179
    %v1181 = vadd.f32 %v1178, 1.0
    %v1182 = vadd.f32 %v1180, 1.0
    %v1183 = vrcp.pop %v1181
    %v1184 = vmul.f32 1.0, %v1183
    %v1185 = vrcp.pop %v1182
    %v1186 = vmul.f32 1.0, %v1185
    %v1187 = vpack.c.bf16 %v1184, %v1184
    %v1188 = vpack.c.bf16 %v1186, %v1186
    %v1191 = vunpack.c.l.b16 %v1187
    %v1192 = vunpack.c.l.b16 %v1188
    %v1193 = vpack.c.b16 %v1192, %v1191
    %1195 = vst [vmem:[#allocation16] sm:$0xff] %v1193
    %v1196 = vld [vmem:[#allocation8] sm:$0xff]
    %v1197 = vld [vmem:[#allocation8 + $0x8] sm:$0xff]
    %v1198 = vld [vmem:[#allocation8 + $0x10] sm:$0xff]
    %v1199 = vld [vmem:[#allocation8 + $0x18] sm:$0xff]
    %v1200 = vld [vmem:[#allocation8 + $0x20] sm:$0xff]
    %v1201 = vld [vmem:[#allocation8 + $0x28] sm:$0xff]
    %v1202 = vld [vmem:[#allocation8 + $0x30] sm:$0xff]
    %v1203 = vld [vmem:[#allocation8 + $0x38] sm:$0xff]
    %v1204 = vld [vmem:[#allocation8 + $0x40] sm:$0xff]
    %v1205 = vld [vmem:[#allocation8 + $0x48] sm:$0xff]
    %v1206 = vld [vmem:[#allocation8 + $0x50] sm:$0xff]
    %v1207 = vld [vmem:[#allocation8 + $0x58] sm:$0xff]
    %v1208 = vld [vmem:[#allocation8 + $0x60] sm:$0xff]
    %v1209 = vld [vmem:[#allocation8 + $0x68] sm:$0xff]
    %v1210 = vld [vmem:[#allocation8 + $0x70] sm:$0xff]
    %v1211 = vld [vmem:[#allocation8 + $0x78] sm:$0xff]
    %v1212 = vld [vmem:[#allocation8 + $0x80] sm:$0xff]
    %v1213 = vld [vmem:[#allocation8 + $0x88] sm:$0xff]
    %v1214 = vld [vmem:[#allocation8 + $0x90] sm:$0xff]
    %v1215 = vld [vmem:[#allocation8 + $0x98] sm:$0xff]
    %v1216 = vld [vmem:[#allocation8 + $0xa0] sm:$0xff]
    %v1217 = vld [vmem:[#allocation8 + $0xa8] sm:$0xff]
    %v1218 = vld [vmem:[#allocation8 + $0xb0] sm:$0xff]
    %v1219 = vld [vmem:[#allocation8 + $0xb8] sm:$0xff]
    %v1220 = vld [vmem:[#allocation8 + $0xc0] sm:$0xff]
    %v1221 = vld [vmem:[#allocation8 + $0xc8] sm:$0xff]
    %v1222 = vld [vmem:[#allocation8 + $0xd0] sm:$0xff]
    %v1223 = vld [vmem:[#allocation8 + $0xd8] sm:$0xff]
    %v1224 = vld [vmem:[#allocation8 + $0xe0] sm:$0xff]
    %v1225 = vld [vmem:[#allocation8 + $0xe8] sm:$0xff]
    %v1226 = vld [vmem:[#allocation8 + $0xf0] sm:$0xff]
    %v1227 = vld [vmem:[#allocation8 + $0xf8] sm:$0xff]
    %v1228 = vld [vmem:[%s6] sm:$0x3]
    %v1230 = vlaneseq
    %v1231 = vshrl.u32 %v1230, 7
    %v1232 = vsub.s32 0, %v1231
    %v1233 = vrot.slane %v1228, %v1232
    %v1234 = vlaneseq
    %v1235 = vshrl.u32 %v1234, 7
    %v1236 = vsub.s32 1, %v1235
    %v1237 = vrot.slane %v1228, %v1236
    %v1272 = vunpack.c.l.b16 %v1196
    %v1273 = vunpack.c.h.b16 %v1196
    %v1274 = vunpack.c.l.b16 %v1197
    %v1275 = vunpack.c.h.b16 %v1197
    %v1276 = vunpack.c.l.b16 %v1198
    %v1277 = vunpack.c.h.b16 %v1198
    %v1278 = vunpack.c.l.b16 %v1199
    %v1279 = vunpack.c.h.b16 %v1199
    %v1280 = vunpack.c.l.b16 %v1200
    %v1281 = vunpack.c.h.b16 %v1200
    %v1282 = vunpack.c.l.b16 %v1201
    %v1283 = vunpack.c.h.b16 %v1201
    %v1284 = vunpack.c.l.b16 %v1202
    %v1285 = vunpack.c.h.b16 %v1202
    %v1286 = vunpack.c.l.b16 %v1203
    %v1287 = vunpack.c.h.b16 %v1203
    %v1288 = vunpack.c.l.b16 %v1204
    %v1289 = vunpack.c.h.b16 %v1204
    %v1290 = vunpack.c.l.b16 %v1205
    %v1291 = vunpack.c.h.b16 %v1205
    %v1292 = vunpack.c.l.b16 %v1206
    %v1293 = vunpack.c.h.b16 %v1206
    %v1294 = vunpack.c.l.b16 %v1207
    %v1295 = vunpack.c.h.b16 %v1207
    %v1296 = vunpack.c.l.b16 %v1208
    %v1297 = vunpack.c.h.b16 %v1208
    %v1298 = vunpack.c.l.b16 %v1209
    %v1299 = vunpack.c.h.b16 %v1209
    %v1300 = vunpack.c.l.b16 %v1210
    %v1301 = vunpack.c.h.b16 %v1210
    %v1302 = vunpack.c.l.b16 %v1211
    %v1303 = vunpack.c.h.b16 %v1211
    %v1304 = vunpack.c.l.b16 %v1212
    %v1305 = vunpack.c.h.b16 %v1212
    %v1306 = vunpack.c.l.b16 %v1213
    %v1307 = vunpack.c.h.b16 %v1213
    %v1308 = vunpack.c.l.b16 %v1214
    %v1309 = vunpack.c.h.b16 %v1214
    %v1310 = vunpack.c.l.b16 %v1215
    %v1311 = vunpack.c.h.b16 %v1215
    %v1312 = vunpack.c.l.b16 %v1216
    %v1313 = vunpack.c.h.b16 %v1216
    %v1314 = vunpack.c.l.b16 %v1217
    %v1315 = vunpack.c.h.b16 %v1217
    %v1316 = vunpack.c.l.b16 %v1218
    %v1317 = vunpack.c.h.b16 %v1218
    %v1318 = vunpack.c.l.b16 %v1219
    %v1319 = vunpack.c.h.b16 %v1219
    %v1320 = vunpack.c.l.b16 %v1220
    %v1321 = vunpack.c.h.b16 %v1220
    %v1322 = vunpack.c.l.b16 %v1221
    %v1323 = vunpack.c.h.b16 %v1221
    %v1324 = vunpack.c.l.b16 %v1222
    %v1325 = vunpack.c.h.b16 %v1222
    %v1326 = vunpack.c.l.b16 %v1223
    %v1327 = vunpack.c.h.b16 %v1223
    %v1328 = vunpack.c.l.b16 %v1224
    %v1329 = vunpack.c.h.b16 %v1224
    %v1330 = vunpack.c.l.b16 %v1225
    %v1331 = vunpack.c.h.b16 %v1225
    %v1332 = vunpack.c.l.b16 %v1226
    %v1333 = vunpack.c.h.b16 %v1226
    %v1334 = vunpack.c.l.b16 %v1227
    %v1335 = vunpack.c.h.b16 %v1227
    %v1336 = vpack.c.b16 %v1274, %v1272
    %v1337 = vpack.c.b16 %v1275, %v1273
    %v1338 = vpack.c.b16 %v1278, %v1276
    %v1339 = vpack.c.b16 %v1279, %v1277
    %v1340 = vpack.c.b16 %v1282, %v1280
    %v1341 = vpack.c.b16 %v1283, %v1281
    %v1342 = vpack.c.b16 %v1286, %v1284
    %v1343 = vpack.c.b16 %v1287, %v1285
    %v1344 = vpack.c.b16 %v1290, %v1288
    %v1345 = vpack.c.b16 %v1291, %v1289
    %v1346 = vpack.c.b16 %v1294, %v1292
    %v1347 = vpack.c.b16 %v1295, %v1293
    %v1348 = vpack.c.b16 %v1298, %v1296
    %v1349 = vpack.c.b16 %v1299, %v1297
    %v1350 = vpack.c.b16 %v1302, %v1300
    %v1351 = vpack.c.b16 %v1303, %v1301
    %v1352 = vpack.c.b16 %v1306, %v1304
    %v1353 = vpack.c.b16 %v1307, %v1305
    %v1354 = vpack.c.b16 %v1310, %v1308
    %v1355 = vpack.c.b16 %v1311, %v1309
    %v1356 = vpack.c.b16 %v1314, %v1312
    %v1357 = vpack.c.b16 %v1315, %v1313
    %v1358 = vpack.c.b16 %v1318, %v1316
    %v1359 = vpack.c.b16 %v1319, %v1317
    %v1360 = vpack.c.b16 %v1322, %v1320
    %v1361 = vpack.c.b16 %v1323, %v1321
    %v1362 = vpack.c.b16 %v1326, %v1324
    %v1363 = vpack.c.b16 %v1327, %v1325
    %v1364 = vpack.c.b16 %v1330, %v1328
    %v1365 = vpack.c.b16 %v1331, %v1329
    %v1366 = vpack.c.b16 %v1334, %v1332
    %v1367 = vpack.c.b16 %v1335, %v1333
    %1400 = vmatprep.subr.bf16.mxu0 %v1351
    %1401 = vmatpush1.bf16.msra.mxu0 %v1350
    %1402 = vmatprep.subr.bf16.mxu0 %v1349
    %1403 = vmatpush1.bf16.msra.mxu0 %v1348
    %1404 = vmatprep.subr.bf16.mxu0 %v1347
    %1405 = vmatpush1.bf16.msra.mxu0 %v1346
    %1406 = vmatprep.subr.bf16.mxu0 %v1345
    %1407 = vmatpush1.bf16.msra.mxu0 %v1344
    %1408 = vmatprep.subr.bf16.mxu0 %v1343
    %1409 = vmatpush1.bf16.msra.mxu0 %v1342
    %1410 = vmatprep.subr.bf16.mxu0 %v1341
    %1411 = vmatpush1.bf16.msra.mxu0 %v1340
    %1412 = vmatprep.subr.bf16.mxu0 %v1339
    %1413 = vmatpush1.bf16.msra.mxu0 %v1338
    %1414 = vmatprep.subr.bf16.mxu0 %v1337
    %1415 = vmatpush1.bf16.msra.mxu0 %v1336
    %1416 = vmatprep.subr.bf16.mxu0 %v1367
    %1417 = vmatpush2.bf16.msra.mxu0 %v1366
    %1418 = vmatprep.subr.bf16.mxu0 %v1365
    %1419 = vmatpush2.bf16.msra.mxu0 %v1364
    %1420 = vmatprep.subr.bf16.mxu0 %v1363
    %1421 = vmatpush2.bf16.msra.mxu0 %v1362
    %1422 = vmatprep.subr.bf16.mxu0 %v1361
    %1423 = vmatpush2.bf16.msra.mxu0 %v1360
    %1424 = vmatprep.subr.bf16.mxu0 %v1359
    %1425 = vmatpush2.bf16.msra.mxu0 %v1358
    %1426 = vmatprep.subr.bf16.mxu0 %v1357
    %1427 = vmatpush2.bf16.msra.mxu0 %v1356
    %1428 = vmatprep.subr.bf16.mxu0 %v1355
    %1429 = vmatpush2.bf16.msra.mxu0 %v1354
    %1430 = vmatprep.subr.bf16.mxu0 %v1353
    %1431 = vmatpush2.bf16.msra.mxu0 %v1352
    %1432 = vmatprep.mubr.bf16.mxu0 %v1188
    %1433 = vmatmul.mubr.bf16.gmra.mxu0 %v1187
    %v1434 = vpop.f32.mrf.mxu0
    %v1435 = vadd.f32 %v1233, %v1434
    %v1436 = vpop.f32.mrf.mxu0
    %v1437 = vadd.f32 %v1237, %v1436
    %v1438 = vpop.f32.mrf.mxu0
    %v1439 = vpop.f32.mrf.mxu0
    %1440 = vdwg.mxu0
    %v1441 = vxor.u32 %v1435, 2147483648
    %v1442 = vxor.u32 %v1437, 2147483648
    %v1443 = vmul.f32 %v1441, 1.442695
    %v1444 = vpow.pop %v1443
    %v1445 = vmul.f32 %v1442, 1.442695
    %v1446 = vpow.pop %v1445
    %v1447 = vadd.f32 %v1444, 1.0
    %v1448 = vadd.f32 %v1446, 1.0
    %v1449 = vrcp.pop %v1447
    %v1450 = vmul.f32 1.0, %v1449
    %v1451 = vrcp.pop %v1448
    %v1452 = vmul.f32 1.0, %v1451
    %v1453 = vpack.c.bf16 %v1450, %v1450
    %v1454 = vpack.c.bf16 %v1452, %v1452
    %v1457 = vunpack.c.l.b16 %v1453
    %v1458 = vunpack.c.l.b16 %v1454
    %v1459 = vpack.c.b16 %v1458, %v1457
    %1461 = vst [vmem:[#allocation17] sm:$0xff] %v1459
    %v1462 = vld [vmem:[#allocation10] sm:$0xff]
    %v1463 = vld [vmem:[#allocation10 + $0x8] sm:$0xff]
    %v1464 = vld [vmem:[#allocation10 + $0x10] sm:$0xff]
    %v1465 = vld [vmem:[#allocation10 + $0x18] sm:$0xff]
    %v1466 = vld [vmem:[#allocation10 + $0x20] sm:$0xff]
    %v1467 = vld [vmem:[#allocation10 + $0x28] sm:$0xff]
    %v1468 = vld [vmem:[#allocation10 + $0x30] sm:$0xff]
    %v1469 = vld [vmem:[#allocation10 + $0x38] sm:$0xff]
    %v1470 = vld [vmem:[#allocation10 + $0x40] sm:$0xff]
    %v1471 = vld [vmem:[#allocation10 + $0x48] sm:$0xff]
    %v1472 = vld [vmem:[#allocation10 + $0x50] sm:$0xff]
    %v1473 = vld [vmem:[#allocation10 + $0x58] sm:$0xff]
    %v1474 = vld [vmem:[#allocation10 + $0x60] sm:$0xff]
    %v1475 = vld [vmem:[#allocation10 + $0x68] sm:$0xff]
    %v1476 = vld [vmem:[#allocation10 + $0x70] sm:$0xff]
    %v1477 = vld [vmem:[#allocation10 + $0x78] sm:$0xff]
    %v1478 = vld [vmem:[#allocation10 + $0x80] sm:$0xff]
    %v1479 = vld [vmem:[#allocation10 + $0x88] sm:$0xff]
    %v1480 = vld [vmem:[#allocation10 + $0x90] sm:$0xff]
    %v1481 = vld [vmem:[#allocation10 + $0x98] sm:$0xff]
    %v1482 = vld [vmem:[#allocation10 + $0xa0] sm:$0xff]
    %v1483 = vld [vmem:[#allocation10 + $0xa8] sm:$0xff]
    %v1484 = vld [vmem:[#allocation10 + $0xb0] sm:$0xff]
    %v1485 = vld [vmem:[#allocation10 + $0xb8] sm:$0xff]
    %v1486 = vld [vmem:[#allocation10 + $0xc0] sm:$0xff]
    %v1487 = vld [vmem:[#allocation10 + $0xc8] sm:$0xff]
    %v1488 = vld [vmem:[#allocation10 + $0xd0] sm:$0xff]
    %v1489 = vld [vmem:[#allocation10 + $0xd8] sm:$0xff]
    %v1490 = vld [vmem:[#allocation10 + $0xe0] sm:$0xff]
    %v1491 = vld [vmem:[#allocation10 + $0xe8] sm:$0xff]
    %v1492 = vld [vmem:[#allocation10 + $0xf0] sm:$0xff]
    %v1493 = vld [vmem:[#allocation10 + $0xf8] sm:$0xff]
    %v1494 = vld [vmem:[%s8] sm:$0x3]
    %v1496 = vlaneseq
    %v1497 = vshrl.u32 %v1496, 7
    %v1498 = vsub.s32 0, %v1497
    %v1499 = vrot.slane %v1494, %v1498
    %v1500 = vlaneseq
    %v1501 = vshrl.u32 %v1500, 7
    %v1502 = vsub.s32 1, %v1501
    %v1503 = vrot.slane %v1494, %v1502
    %v1538 = vunpack.c.l.b16 %v1462
    %v1539 = vunpack.c.h.b16 %v1462
    %v1540 = vunpack.c.l.b16 %v1463
    %v1541 = vunpack.c.h.b16 %v1463
    %v1542 = vunpack.c.l.b16 %v1464
    %v1543 = vunpack.c.h.b16 %v1464
    %v1544 = vunpack.c.l.b16 %v1465
    %v1545 = vunpack.c.h.b16 %v1465
    %v1546 = vunpack.c.l.b16 %v1466
    %v1547 = vunpack.c.h.b16 %v1466
    %v1548 = vunpack.c.l.b16 %v1467
    %v1549 = vunpack.c.h.b16 %v1467
    %v1550 = vunpack.c.l.b16 %v1468
    %v1551 = vunpack.c.h.b16 %v1468
    %v1552 = vunpack.c.l.b16 %v1469
    %v1553 = vunpack.c.h.b16 %v1469
    %v1554 = vunpack.c.l.b16 %v1470
    %v1555 = vunpack.c.h.b16 %v1470
    %v1556 = vunpack.c.l.b16 %v1471
    %v1557 = vunpack.c.h.b16 %v1471
    %v1558 = vunpack.c.l.b16 %v1472
    %v1559 = vunpack.c.h.b16 %v1472
    %v1560 = vunpack.c.l.b16 %v1473
    %v1561 = vunpack.c.h.b16 %v1473
    %v1562 = vunpack.c.l.b16 %v1474
    %v1563 = vunpack.c.h.b16 %v1474
    %v1564 = vunpack.c.l.b16 %v1475
    %v1565 = vunpack.c.h.b16 %v1475
    %v1566 = vunpack.c.l.b16 %v1476
    %v1567 = vunpack.c.h.b16 %v1476
    %v1568 = vunpack.c.l.b16 %v1477
    %v1569 = vunpack.c.h.b16 %v1477
    %v1570 = vunpack.c.l.b16 %v1478
    %v1571 = vunpack.c.h.b16 %v1478
    %v1572 = vunpack.c.l.b16 %v1479
    %v1573 = vunpack.c.h.b16 %v1479
    %v1574 = vunpack.c.l.b16 %v1480
    %v1575 = vunpack.c.h.b16 %v1480
    %v1576 = vunpack.c.l.b16 %v1481
    %v1577 = vunpack.c.h.b16 %v1481
    %v1578 = vunpack.c.l.b16 %v1482
    %v1579 = vunpack.c.h.b16 %v1482
    %v1580 = vunpack.c.l.b16 %v1483
    %v1581 = vunpack.c.h.b16 %v1483
    %v1582 = vunpack.c.l.b16 %v1484
    %v1583 = vunpack.c.h.b16 %v1484
    %v1584 = vunpack.c.l.b16 %v1485
    %v1585 = vunpack.c.h.b16 %v1485
    %v1586 = vunpack.c.l.b16 %v1486
    %v1587 = vunpack.c.h.b16 %v1486
    %v1588 = vunpack.c.l.b16 %v1487
    %v1589 = vunpack.c.h.b16 %v1487
    %v1590 = vunpack.c.l.b16 %v1488
    %v1591 = vunpack.c.h.b16 %v1488
    %v1592 = vunpack.c.l.b16 %v1489
    %v1593 = vunpack.c.h.b16 %v1489
    %v1594 = vunpack.c.l.b16 %v1490
    %v1595 = vunpack.c.h.b16 %v1490
    %v1596 = vunpack.c.l.b16 %v1491
    %v1597 = vunpack.c.h.b16 %v1491
    %v1598 = vunpack.c.l.b16 %v1492
    %v1599 = vunpack.c.h.b16 %v1492
    %v1600 = vunpack.c.l.b16 %v1493
    %v1601 = vunpack.c.h.b16 %v1493
    %v1602 = vpack.c.b16 %v1540, %v1538
    %v1603 = vpack.c.b16 %v1541, %v1539
    %v1604 = vpack.c.b16 %v1544, %v1542
    %v1605 = vpack.c.b16 %v1545, %v1543
    %v1606 = vpack.c.b16 %v1548, %v1546
    %v1607 = vpack.c.b16 %v1549, %v1547
    %v1608 = vpack.c.b16 %v1552, %v1550
    %v1609 = vpack.c.b16 %v1553, %v1551
    %v1610 = vpack.c.b16 %v1556, %v1554
    %v1611 = vpack.c.b16 %v1557, %v1555
    %v1612 = vpack.c.b16 %v1560, %v1558
    %v1613 = vpack.c.b16 %v1561, %v1559
    %v1614 = vpack.c.b16 %v1564, %v1562
    %v1615 = vpack.c.b16 %v1565, %v1563
    %v1616 = vpack.c.b16 %v1568, %v1566
    %v1617 = vpack.c.b16 %v1569, %v1567
    %v1618 = vpack.c.b16 %v1572, %v1570
    %v1619 = vpack.c.b16 %v1573, %v1571
    %v1620 = vpack.c.b16 %v1576, %v1574
    %v1621 = vpack.c.b16 %v1577, %v1575
    %v1622 = vpack.c.b16 %v1580, %v1578
    %v1623 = vpack.c.b16 %v1581, %v1579
    %v1624 = vpack.c.b16 %v1584, %v1582
    %v1625 = vpack.c.b16 %v1585, %v1583
    %v1626 = vpack.c.b16 %v1588, %v1586
    %v1627 = vpack.c.b16 %v1589, %v1587
    %v1628 = vpack.c.b16 %v1592, %v1590
    %v1629 = vpack.c.b16 %v1593, %v1591
    %v1630 = vpack.c.b16 %v1596, %v1594
    %v1631 = vpack.c.b16 %v1597, %v1595
    %v1632 = vpack.c.b16 %v1600, %v1598
    %v1633 = vpack.c.b16 %v1601, %v1599
    %1666 = vmatprep.subr.bf16.mxu0 %v1617
    %1667 = vmatpush1.bf16.msra.mxu0 %v1616
    %1668 = vmatprep.subr.bf16.mxu0 %v1615
    %1669 = vmatpush1.bf16.msra.mxu0 %v1614
    %1670 = vmatprep.subr.bf16.mxu0 %v1613
    %1671 = vmatpush1.bf16.msra.mxu0 %v1612
    %1672 = vmatprep.subr.bf16.mxu0 %v1611
    %1673 = vmatpush1.bf16.msra.mxu0 %v1610
    %1674 = vmatprep.subr.bf16.mxu0 %v1609
    %1675 = vmatpush1.bf16.msra.mxu0 %v1608
    %1676 = vmatprep.subr.bf16.mxu0 %v1607
    %1677 = vmatpush1.bf16.msra.mxu0 %v1606
    %1678 = vmatprep.subr.bf16.mxu0 %v1605
    %1679 = vmatpush1.bf16.msra.mxu0 %v1604
    %1680 = vmatprep.subr.bf16.mxu0 %v1603
    %1681 = vmatpush1.bf16.msra.mxu0 %v1602
    %1682 = vmatprep.subr.bf16.mxu0 %v1633
    %1683 = vmatpush2.bf16.msra.mxu0 %v1632
    %1684 = vmatprep.subr.bf16.mxu0 %v1631
    %1685 = vmatpush2.bf16.msra.mxu0 %v1630
    %1686 = vmatprep.subr.bf16.mxu0 %v1629
    %1687 = vmatpush2.bf16.msra.mxu0 %v1628
    %1688 = vmatprep.subr.bf16.mxu0 %v1627
    %1689 = vmatpush2.bf16.msra.mxu0 %v1626
    %1690 = vmatprep.subr.bf16.mxu0 %v1625
    %1691 = vmatpush2.bf16.msra.mxu0 %v1624
    %1692 = vmatprep.subr.bf16.mxu0 %v1623
    %1693 = vmatpush2.bf16.msra.mxu0 %v1622
    %1694 = vmatprep.subr.bf16.mxu0 %v1621
    %1695 = vmatpush2.bf16.msra.mxu0 %v1620
    %1696 = vmatprep.subr.bf16.mxu0 %v1619
    %1697 = vmatpush2.bf16.msra.mxu0 %v1618
    %1698 = vmatprep.mubr.bf16.mxu0 %v1454
    %1699 = vmatmul.mubr.bf16.gmra.mxu0 %v1453
    %v1700 = vpop.f32.mrf.mxu0
    %v1701 = vadd.f32 %v1499, %v1700
    %v1702 = vpop.f32.mrf.mxu0
    %v1703 = vadd.f32 %v1503, %v1702
    %v1704 = vpop.f32.mrf.mxu0
    %v1705 = vpop.f32.mrf.mxu0
    %1706 = vdwg.mxu0
    %v1707 = vxor.u32 %v1701, 2147483648
    %v1708 = vxor.u32 %v1703, 2147483648
    %v1709 = vmul.f32 %v1707, 1.442695
    %v1710 = vpow.pop %v1709
    %v1711 = vmul.f32 %v1708, 1.442695
    %v1712 = vpow.pop %v1711
    %v1713 = vadd.f32 %v1710, 1.0
    %v1714 = vadd.f32 %v1712, 1.0
    %v1715 = vrcp.pop %v1713
    %v1716 = vmul.f32 1.0, %v1715
    %v1717 = vrcp.pop %v1714
    %v1718 = vmul.f32 1.0, %v1717
    %v1719 = vpack.c.bf16 %v1716, %v1716
    %v1720 = vpack.c.bf16 %v1718, %v1718
    %v1723 = vunpack.c.l.b16 %v1719
    %v1724 = vunpack.c.l.b16 %v1720
    %v1725 = vpack.c.b16 %v1724, %v1723
    %1727 = vst [vmem:[#allocation19] sm:$0xff] %v1725
    %v1728 = vld [vmem:[#allocation11] sm:$0xf]
    %v1729 = vld [vmem:[#allocation11 + $0x4] sm:$0xf]
    %v1730 = vld [vmem:[#allocation11 + $0x8] sm:$0xf]
    %v1731 = vld [vmem:[#allocation11 + $0xc] sm:$0xf]
    %v1732 = vld [vmem:[#allocation11 + $0x10] sm:$0xf]
    %v1733 = vld [vmem:[#allocation11 + $0x14] sm:$0xf]
    %v1734 = vld [vmem:[#allocation11 + $0x18] sm:$0xf]
    %v1735 = vld [vmem:[#allocation11 + $0x1c] sm:$0xf]
    %v1736 = vld [vmem:[#allocation11 + $0x20] sm:$0xf]
    %v1737 = vld [vmem:[#allocation11 + $0x24] sm:$0xf]
    %v1738 = vld [vmem:[#allocation11 + $0x28] sm:$0xf]
    %v1739 = vld [vmem:[#allocation11 + $0x2c] sm:$0xf]
    %v1740 = vld [vmem:[#allocation11 + $0x30] sm:$0xf]
    %v1741 = vld [vmem:[#allocation11 + $0x34] sm:$0xf]
    %v1742 = vld [vmem:[#allocation11 + $0x38] sm:$0xf]
    %v1743 = vld [vmem:[#allocation11 + $0x3c] sm:$0xf]
    %v1744 = vld [vmem:[#allocation11 + $0x40] sm:$0xf]
    %v1745 = vld [vmem:[#allocation11 + $0x44] sm:$0xf]
    %v1746 = vld [vmem:[#allocation11 + $0x48] sm:$0xf]
    %v1747 = vld [vmem:[#allocation11 + $0x4c] sm:$0xf]
    %v1748 = vld [vmem:[#allocation11 + $0x50] sm:$0xf]
    %v1749 = vld [vmem:[#allocation11 + $0x54] sm:$0xf]
    %v1750 = vld [vmem:[#allocation11 + $0x58] sm:$0xf]
    %v1751 = vld [vmem:[#allocation11 + $0x5c] sm:$0xf]
    %v1752 = vld [vmem:[#allocation11 + $0x60] sm:$0xf]
    %v1753 = vld [vmem:[#allocation11 + $0x64] sm:$0xf]
    %v1754 = vld [vmem:[#allocation11 + $0x68] sm:$0xf]
    %v1755 = vld [vmem:[#allocation11 + $0x6c] sm:$0xf]
    %v1756 = vld [vmem:[#allocation11 + $0x70] sm:$0xf]
    %v1757 = vld [vmem:[#allocation11 + $0x74] sm:$0xf]
    %v1758 = vld [vmem:[#allocation11 + $0x78] sm:$0xf]
    %v1759 = vld [vmem:[#allocation11 + $0x7c] sm:$0xf]
    %v1760 = vld [vmem:[%s10] sm:$0x1]
    %v1762 = vlaneseq
    %v1763 = vshrl.u32 %v1762, 7
    %v1764 = vsub.s32 0, %v1763
    %v1765 = vrot.slane %v1760, %v1764
    %v1799 = vunpack.c.l.b16 %v1728
    %v1800 = vunpack.c.l.b16 %v1729
    %v1801 = vunpack.c.l.b16 %v1730
    %v1802 = vunpack.c.l.b16 %v1731
    %v1803 = vunpack.c.l.b16 %v1732
    %v1804 = vunpack.c.l.b16 %v1733
    %v1805 = vunpack.c.l.b16 %v1734
    %v1806 = vunpack.c.l.b16 %v1735
    %v1807 = vunpack.c.l.b16 %v1736
    %v1808 = vunpack.c.l.b16 %v1737
    %v1809 = vunpack.c.l.b16 %v1738
    %v1810 = vunpack.c.l.b16 %v1739
    %v1811 = vunpack.c.l.b16 %v1740
    %v1812 = vunpack.c.l.b16 %v1741
    %v1813 = vunpack.c.l.b16 %v1742
    %v1814 = vunpack.c.l.b16 %v1743
    %v1815 = vunpack.c.l.b16 %v1744
    %v1816 = vunpack.c.l.b16 %v1745
    %v1817 = vunpack.c.l.b16 %v1746
    %v1818 = vunpack.c.l.b16 %v1747
    %v1819 = vunpack.c.l.b16 %v1748
    %v1820 = vunpack.c.l.b16 %v1749
    %v1821 = vunpack.c.l.b16 %v1750
    %v1822 = vunpack.c.l.b16 %v1751
    %v1823 = vunpack.c.l.b16 %v1752
    %v1824 = vunpack.c.l.b16 %v1753
    %v1825 = vunpack.c.l.b16 %v1754
    %v1826 = vunpack.c.l.b16 %v1755
    %v1827 = vunpack.c.l.b16 %v1756
    %v1828 = vunpack.c.l.b16 %v1757
    %v1829 = vunpack.c.l.b16 %v1758
    %v1830 = vunpack.c.l.b16 %v1759
    %v1831 = vpack.c.b16 %v1800, %v1799
    %v1832 = vpack.c.b16 %v1802, %v1801
    %v1833 = vpack.c.b16 %v1804, %v1803
    %v1834 = vpack.c.b16 %v1806, %v1805
    %v1835 = vpack.c.b16 %v1808, %v1807
    %v1836 = vpack.c.b16 %v1810, %v1809
    %v1837 = vpack.c.b16 %v1812, %v1811
    %v1838 = vpack.c.b16 %v1814, %v1813
    %v1839 = vpack.c.b16 %v1816, %v1815
    %v1840 = vpack.c.b16 %v1818, %v1817
    %v1841 = vpack.c.b16 %v1820, %v1819
    %v1842 = vpack.c.b16 %v1822, %v1821
    %v1843 = vpack.c.b16 %v1824, %v1823
    %v1844 = vpack.c.b16 %v1826, %v1825
    %v1845 = vpack.c.b16 %v1828, %v1827
    %v1846 = vpack.c.b16 %v1830, %v1829
    %1863 = vmatprep.subr.bf16.mxu0 0
    %1864 = vmatpush1.bf16.msra.mxu0 %v1838
    %1865 = vmatprep.subr.bf16.mxu0 0
    %1866 = vmatpush1.bf16.msra.mxu0 %v1837
    %1867 = vmatprep.subr.bf16.mxu0 0
    %1868 = vmatpush1.bf16.msra.mxu0 %v1836
    %1869 = vmatprep.subr.bf16.mxu0 0
    %1870 = vmatpush1.bf16.msra.mxu0 %v1835
    %1871 = vmatprep.subr.bf16.mxu0 0
    %1872 = vmatpush1.bf16.msra.mxu0 %v1834
    %1873 = vmatprep.subr.bf16.mxu0 0
    %1874 = vmatpush1.bf16.msra.mxu0 %v1833
    %1875 = vmatprep.subr.bf16.mxu0 0
    %1876 = vmatpush1.bf16.msra.mxu0 %v1832
    %1877 = vmatprep.subr.bf16.mxu0 0
    %1878 = vmatpush1.bf16.msra.mxu0 %v1831
    %1879 = vmatprep.subr.bf16.mxu0 0
    %1880 = vmatpush2.bf16.msra.mxu0 %v1846
    %1881 = vmatprep.subr.bf16.mxu0 0
    %1882 = vmatpush2.bf16.msra.mxu0 %v1845
    %1883 = vmatprep.subr.bf16.mxu0 0
    %1884 = vmatpush2.bf16.msra.mxu0 %v1844
    %1885 = vmatprep.subr.bf16.mxu0 0
    %1886 = vmatpush2.bf16.msra.mxu0 %v1843
    %1887 = vmatprep.subr.bf16.mxu0 0
    %1888 = vmatpush2.bf16.msra.mxu0 %v1842
    %1889 = vmatprep.subr.bf16.mxu0 0
    %1890 = vmatpush2.bf16.msra.mxu0 %v1841
    %1891 = vmatprep.subr.bf16.mxu0 0
    %1892 = vmatpush2.bf16.msra.mxu0 %v1840
    %1893 = vmatprep.subr.bf16.mxu0 0
    %1894 = vmatpush2.bf16.msra.mxu0 %v1839
    %1895 = vmatprep.mubr.bf16.mxu0 %v1720
    %1896 = vmatmul.mubr.bf16.gmra.mxu0 %v1719
    %v1897 = vpop.f32.mrf.mxu0
    %v1898 = vadd.f32 %v1765, %v1897
    %v1899 = vpop.f32.mrf.mxu0
    %v1900 = vpop.f32.mrf.mxu0
    %v1901 = vpop.f32.mrf.mxu0
    %1902 = vdwg.mxu0
    %1903 = vst [vmem:[#allocation13] sm:$0xff] %v1898
    // Predicated region
    $region70: #{tpu_custom_call.1} parent=1 // pred_check
      _
    $region71: #{tpu_custom_call.1} parent=1 // pred_check_branch
      %1905 = sbr.rel (0) target = $region73
    $region72: #{tpu_custom_call.1} parent=1 // pred_region
      %s1907 = ssub.s32 128, 128
      %1908 = vsyncadd [#allocation4], %s1907
      %s1910 = sshll.u32 [#allocation13], 4
      %s1911 = int_to_ptr.vmem [resolvable:$true] %s1910
      %1913 = dma.vmem_to_hbm [thread:$0]  %s1911, 128, %s11, [#allocation4]
    $region73: #{tpu_custom_call.1} parent=1 // pred_fallthru
      _
    // Predicated region
    $region74: #{tpu_custom_call.1} parent=1 // pred_check
      _
    $region75: #{tpu_custom_call.1} parent=1 // pred_check_branch
      %1915 = sbr.rel (0) target = $region77
    $region76: #{tpu_custom_call.1} parent=1 // pred_region
      %s1917 = ssub.s32 128, 128
      %1918 = vsyncadd [#allocation15], %s1917
      %s1920 = sshll.u32 [#allocation14], 4
      %s1921 = int_to_ptr.vmem [resolvable:$true] %s1920
      %1923 = dma.vmem_to_hbm [thread:$0]  %s1921, 128, %s12, [#allocation15]
    $region77: #{tpu_custom_call.1} parent=1 // pred_fallthru
      _
    // Predicated region
    $region78: #{tpu_custom_call.1} parent=1 // pred_check
      _
    $region79: #{tpu_custom_call.1} parent=1 // pred_check_branch
      %1925 = sbr.rel (0) target = $region81
    $region80: #{tpu_custom_call.1} parent=1 // pred_region
      %s1927 = ssub.s32 128, 128
      %1928 = vsyncadd [#allocation15], %s1927
      %s1930 = sshll.u32 [#allocation16], 4
      %s1931 = int_to_ptr.vmem [resolvable:$true] %s1930
      %1933 = dma.vmem_to_hbm [thread:$0]  %s1931, 128, %s13, [#allocation15]
    $region81: #{tpu_custom_call.1} parent=1 // pred_fallthru
      _
    // Predicated region
    $region82: #{tpu_custom_call.1} parent=1 // pred_check
      _
    $region83: #{tpu_custom_call.1} parent=1 // pred_check_branch
      %1935 = sbr.rel (0) target = $region85
    $region84: #{tpu_custom_call.1} parent=1 // pred_region
      %s1937 = ssub.s32 128, 128
      %1938 = vsyncadd [#allocation18], %s1937
      %s1940 = sshll.u32 [#allocation17], 4
      %s1941 = int_to_ptr.vmem [resolvable:$true] %s1940
      %1943 = dma.vmem_to_hbm [thread:$0]  %s1941, 128, %s14, [#allocation18]
    $region85: #{tpu_custom_call.1} parent=1 // pred_fallthru
      _
    // Predicated region
    $region86: #{tpu_custom_call.1} parent=1 // pred_check
      _
    $region87: #{tpu_custom_call.1} parent=1 // pred_check_branch
      %1945 = sbr.rel (0) target = $region89
    $region88: #{tpu_custom_call.1} parent=1 // pred_region
      %s1947 = ssub.s32 128, 128
      %1948 = vsyncadd [#allocation18], %s1947
      %s1950 = sshll.u32 [#allocation19], 4
      %s1951 = int_to_ptr.vmem [resolvable:$true] %s1950
      %1953 = dma.vmem_to_hbm [thread:$0]  %s1951, 128, %s15, [#allocation18]
    $region89: #{tpu_custom_call.1} parent=1 // pred_fallthru
      _
    // Predicated region
    $region90: #{tpu_custom_call.1} parent=1 // pred_check
      _
    $region91: #{tpu_custom_call.1} parent=1 // pred_check_branch
      %1955 = sbr.rel (0) target = $region93
    $region92: #{tpu_custom_call.1} parent=1 // pred_region
      %1956 = dma.done [#allocation4], 128
    $region93: #{tpu_custom_call.1} parent=1 // pred_fallthru
      _
    // Predicated region
    $region94: #{tpu_custom_call.1} parent=1 // pred_check
      _
    $region95: #{tpu_custom_call.1} parent=1 // pred_check_branch
      %1958 = sbr.rel (0) target = $region97
    $region96: #{tpu_custom_call.1} parent=1 // pred_region
      %1959 = dma.done [#allocation15], 128
    $region97: #{tpu_custom_call.1} parent=1 // pred_fallthru
      _
    // Predicated region
    $region98: #{tpu_custom_call.1} parent=1 // pred_check
      _
    $region99: #{tpu_custom_call.1} parent=1 // pred_check_branch
      %1961 = sbr.rel (0) target = $region101
    $region100: #{tpu_custom_call.1} parent=1 // pred_region
      %1962 = dma.done [#allocation15], 128
    $region101: #{tpu_custom_call.1} parent=1 // pred_fallthru
      _
    // Predicated region
    $region102: #{tpu_custom_call.1} parent=1 // pred_check
      _
    $region103: #{tpu_custom_call.1} parent=1 // pred_check_branch
      %1964 = sbr.rel (0) target = $region105
    $region104: #{tpu_custom_call.1} parent=1 // pred_region
      %1965 = dma.done [#allocation18], 128
    $region105: #{tpu_custom_call.1} parent=1 // pred_fallthru
      _
    // Predicated region
    $region106: #{tpu_custom_call.1} parent=1 // pred_check
      _
    $region107: #{tpu_custom_call.1} parent=1 // pred_check_branch
      %1967 = sbr.rel (0) target = $region109
    $region108: #{tpu_custom_call.1} parent=1 // pred_region
      %1968 = dma.done [#allocation18], 128
    $region109: #{tpu_custom_call.1} parent=1 // pred_fallthru
      _
    %1969 = vsyncpa [#allocation3], 1
    %1970 = vsyncpa [#allocation6], 1
    %1971 = vsyncpa [#allocation9], 1
    %1972 = vsyncpa [#allocation12], 1
    %1973 = vsyncpa [#allocation4], 1
    %1974 = vsyncpa [#allocation15], 1
    %1975 = vsyncpa [#allocation18], 1

</llo_original>
